<compile_context>
chip_gen: v7x
topology: tpu7x:2x2x1
jax: 0.10.0
libtpu: 0.0.40
codegen_flags: <defaults>
</compile_context>

<pallas_src>
import jax
import jax.numpy as jnp
import numpy as np
from jax.experimental import pallas as pl
from jax.experimental.pallas import tpu as pltpu


def position_att_kernel(x_ref, xq_ref, wq_ref, wk_ref, wv_ref, wa_ref,
                        bq_ref, bk_ref, bv_ref, scal_ref,
                        out_ref, outa_ref):
    x = x_ref[0]                                   # (C, N)   all key/value pixels
    xq = xq_ref[0]                                 # (C, TQ)  this query tile

    # 1x1 convs == channel matmuls (channels-first, biases broadcast over lanes)
    k = jnp.dot(wk_ref[...], x, preferred_element_type=jnp.float32) + bk_ref[...]   # (Cq, N)
    v = jnp.dot(wv_ref[...], x, preferred_element_type=jnp.float32) + bv_ref[...]   # (C, N)
    q = jnp.dot(wq_ref[...], xq, preferred_element_type=jnp.float32) + bq_ref[...]  # (Cq, TQ)

    # energy_t[m, n] = <k[:, m], q[:, n]>  -- contract the channel axis directly,
    # no explicit transpose / relayout of k or q before the MXU.
    energy_t = jax.lax.dot_general(
        k, q, dimension_numbers=(((0,), (0,)), ((), ())),
        preferred_element_type=jnp.float32)                                          # (N, TQ)

    # Softmax over keys (axis 0).  Normalisation is deferred to after p @ v so
    # the divide shrinks from (N, TQ) elements to a (1, TQ) reciprocal.
    e_max = jnp.max(energy_t, axis=0, keepdims=True)      # (1, TQ)
    p = jnp.exp(energy_t - e_max)                          # (N, TQ)
    denom = jnp.sum(p, axis=0, keepdims=True)              # (1, TQ)

    # out[c, n] = sum_m v[c, m] * p[m, n]
    out = jnp.dot(v, p, preferred_element_type=jnp.float32)                          # (C, TQ)
    # approx=True would push this onto the EUP slot; kept exact to preserve the
    # 1e-4 comparison tolerance against the reference.
    inv = pl.reciprocal(denom, approx=False)
    out = out * inv                                                                  # (C, TQ)

    # Class-agnostic gate: 1x1 conv to a single channel == a C-row sublane
    # reduction on the VPU/XLU (avoids a lane-width-1 MXU matmul).
    agn = jnp.sum(out * wa_ref[...], axis=0, keepdims=True) + scal_ref[0]            # (1, TQ)
    agn = jax.nn.sigmoid(agn)
    out_a = out * (1.0 - agn)                                                        # (C, TQ)

    gamma = scal_ref[1]
    out_ref[0] = (gamma * out + xq).astype(out_ref.dtype)
    outa_ref[0] = out_a.astype(outa_ref.dtype)


def _vmem_limit_bytes(C, Cq, N, TQ):
    f32 = 4
    live = (2 * C * N                 # x block (double-buffered)
            + 2 * C * TQ              # query-tile block (double-buffered)
            + 2 * 2 * C * TQ          # two output blocks (double-buffered)
            + 3 * N * TQ              # energy_t / p temporaries + headroom
            + Cq * N + C * N + Cq * TQ + 2 * C * TQ    # k, v, q, out, out_a values
            + C * C + 2 * Cq * C + 2 * Cq + 3 * C)     # weights + biases
    return int(min(100 * 1024 * 1024, max(16 * 1024 * 1024, 2 * f32 * live)))


def position_att(x_nchw, wq, bq, wk, bk, wv, bv, wa, ba, gamma):
    """x_nchw: (B, C, W, H).  Conv weights are (Cout, Cin): wq/wk (Cq, C),
    wv (C, C), wa (1, C); biases 1-D; gamma shape (1,)."""
    B, C, W, H = x_nchw.shape
    N = W * H
    Cq = wq.shape[0]

    # Free reshape: channels-first data order is kept, no HBM transpose pass.
    x = x_nchw.reshape(B, C, N)

    # Query tiling keeps peak VMEM at O(N * TQ) and lets v7x shard tiles
    # across its two TensorCores.
    TQ = N if N <= 512 else 512
    if N % TQ != 0:
        TQ = N  # TODO(synk): ragged query tiling when N is not a multiple of 512
    n_qt = N // TQ

    scal = jnp.concatenate([ba.reshape(1), gamma.reshape(1)]).astype(jnp.float32)

    def wspec(shape):
        return pl.BlockSpec(shape, lambda b, qt: (0,) * len(shape))

    out, out_a = pl.pallas_call(
        position_att_kernel,
        out_shape=(jax.ShapeDtypeStruct((B, C, N), x.dtype),
                   jax.ShapeDtypeStruct((B, C, N), x.dtype)),
        grid=(B, n_qt),
        in_specs=[
            pl.BlockSpec((1, C, N), lambda b, qt: (b, 0, 0)),    # x (all keys/values)
            pl.BlockSpec((1, C, TQ), lambda b, qt: (b, 0, qt)),  # x query tile
            wspec((Cq, C)), wspec((Cq, C)), wspec((C, C)), wspec((C, 1)),
            wspec((Cq, 1)), wspec((Cq, 1)), wspec((C, 1)),
            pl.BlockSpec(memory_space=pltpu.MemorySpace.SMEM),   # [ba, gamma] scalars
        ],
        out_specs=(pl.BlockSpec((1, C, TQ), lambda b, qt: (b, 0, qt)),
                   pl.BlockSpec((1, C, TQ), lambda b, qt: (b, 0, qt))),
        compiler_params=pltpu.CompilerParams(
            dimension_semantics=("parallel", "parallel"),
            vmem_limit_bytes=_vmem_limit_bytes(C, Cq, N, TQ)),
    )(x, x,
      wq, wk, wv, wa.reshape(C, 1),
      bq.reshape(Cq, 1), bk.reshape(Cq, 1), bv.reshape(C, 1),
      scal)

    return out.reshape(B, C, W, H), out_a.reshape(B, C, W, H)


def reference(x, wq, bq, wk, bk, wv, bv, wa, ba, gamma):
    """Pure-JAX reference matching the PyTorch forward exactly (NCHW)."""
    B, C, W, H = x.shape
    N = W * H

    def conv1x1(t, w, b):  # w: (Cout, Cin)
        return jnp.einsum('bcwh,oc->bowh', t, w) + b.reshape(1, -1, 1, 1)

    q = conv1x1(x, wq, bq).reshape(B, -1, N).transpose(0, 2, 1)   # (B, N, Cq)
    k = conv1x1(x, wk, bk).reshape(B, -1, N)                      # (B, Cq, N)
    energy = jnp.einsum('bnc,bcm->bnm', q, k)                     # (B, N, N)
    attn = jax.nn.softmax(energy, axis=-1)
    v = conv1x1(x, wv, bv).reshape(B, -1, N)                      # (B, C, N)
    out = jnp.einsum('bcm,bnm->bcn', v, attn).reshape(B, C, W, H)
    agn = jax.nn.sigmoid(conv1x1(out, wa, ba))                    # (B, 1, W, H)
    out_a = out * (1.0 - agn)
    out_final = gamma * out + x
    return out_final, out_a


if __name__ == "__main__":
    B, C, W, H = 2, 4, 16, 16
    Cq = C // 2

    key = jax.random.PRNGKey(0)
    keys = jax.random.split(key, 9)
    x = jax.random.normal(keys[0], (B, C, W, H), dtype=jnp.float32)

    # Deterministic parameter init (conv-style weights: (Cout, Cin))
    wq = 0.2 * jax.random.normal(keys[1], (Cq, C), dtype=jnp.float32)
    bq = 0.1 * jax.random.normal(keys[2], (Cq,), dtype=jnp.float32)
    wk = 0.2 * jax.random.normal(keys[3], (Cq, C), dtype=jnp.float32)
    bk = 0.1 * jax.random.normal(keys[4], (Cq,), dtype=jnp.float32)
    wv = 0.2 * jax.random.normal(keys[5], (C, C), dtype=jnp.float32)
    bv = 0.1 * jax.random.normal(keys[6], (C,), dtype=jnp.float32)
    wa = 0.2 * jax.random.normal(keys[7], (1, C), dtype=jnp.float32)
    ba = 0.1 * jax.random.normal(keys[8], (1,), dtype=jnp.float32)
    gamma = jnp.zeros((1,), dtype=jnp.float32)  # matches nn.Parameter(torch.zeros(1))

    out, out_a = position_att(x, wq, bq, wk, bk, wv, bv, wa, ba, gamma)
    out, out_a = jax.block_until_ready((out, out_a))

    ref_out, ref_out_a = reference(x, wq, bq, wk, bk, wv, bv, wa, ba, gamma)
    np.testing.assert_allclose(np.asarray(out), np.asarray(ref_out), rtol=1e-4, atol=1e-4)
    np.testing.assert_allclose(np.asarray(out_a), np.asarray(ref_out_a), rtol=1e-4, atol=1e-4)

    print("KERNEL_OK")
</pallas_src>

<mosaic_0001>
module attributes {stable_mosaic.version = 11 : i64} {
  func.func @position_att_kernel(%arg0: i32, %arg1: i32, %arg2: memref<1x4x256xf32, #tpu.memory_space<vmem>>, %arg3: memref<1x4x256xf32, #tpu.memory_space<vmem>>, %arg4: memref<2x4xf32, #tpu.memory_space<vmem>>, %arg5: memref<2x4xf32, #tpu.memory_space<vmem>>, %arg6: memref<4x4xf32, #tpu.memory_space<vmem>>, %arg7: memref<4x1xf32, #tpu.memory_space<vmem>>, %arg8: memref<2x1xf32, #tpu.memory_space<vmem>>, %arg9: memref<2x1xf32, #tpu.memory_space<vmem>>, %arg10: memref<4x1xf32, #tpu.memory_space<vmem>>, %arg11: memref<2xf32, #tpu.memory_space<smem>>, %arg12: memref<1x4x256xf32, #tpu.memory_space<vmem>>, %arg13: memref<1x4x256xf32, #tpu.memory_space<vmem>>) attributes {dimension_semantics = [#tpu.dimension_semantics<parallel>, #tpu.dimension_semantics<parallel>], iteration_bounds = array<i64: 2, 1>, scalar_prefetch = 0 : i64, scratch_operands = 0 : i64, tpu.core_type = #tpu.core_type<tc>, window_params = [{transform_indices = @transform_0, window_bounds = array<i64: 1, 4, 256>}, {transform_indices = @transform_1, window_bounds = array<i64: 1, 4, 256>}, {pipeline_mode = #tpu.pipeline_mode<synchronous>, transform_indices = @transform_2, window_bounds = array<i64: 2, 4>}, {pipeline_mode = #tpu.pipeline_mode<synchronous>, transform_indices = @transform_3, window_bounds = array<i64: 2, 4>}, {pipeline_mode = #tpu.pipeline_mode<synchronous>, transform_indices = @transform_4, window_bounds = array<i64: 4, 4>}, {pipeline_mode = #tpu.pipeline_mode<synchronous>, transform_indices = @transform_5, window_bounds = array<i64: 4, 1>}, {pipeline_mode = #tpu.pipeline_mode<synchronous>, transform_indices = @transform_6, window_bounds = array<i64: 2, 1>}, {pipeline_mode = #tpu.pipeline_mode<synchronous>, transform_indices = @transform_7, window_bounds = array<i64: 2, 1>}, {pipeline_mode = #tpu.pipeline_mode<synchronous>, transform_indices = @transform_8, window_bounds = array<i64: 4, 1>}, {transform_indices = @transform_9, window_bounds = array<i64: 2>}, {transform_indices = @transform_10, window_bounds = array<i64: 1, 4, 256>}, {transform_indices = @transform_11, window_bounds = array<i64: 1, 4, 256>}]} {
    %c0 = arith.constant 0 : index
    %c0_0 = arith.constant 0 : index
    %c0_1 = arith.constant 0 : index
    %0 = vector.load %arg2[%c0, %c0_0, %c0_1] : memref<1x4x256xf32, #tpu.memory_space<vmem>>, vector<1x4x256xf32>
    %1 = vector.shape_cast %0 : vector<1x4x256xf32> to vector<4x256xf32>
    %c0_2 = arith.constant 0 : index
    %c0_3 = arith.constant 0 : index
    %c0_4 = arith.constant 0 : index
    %2 = vector.load %arg3[%c0_2, %c0_3, %c0_4] : memref<1x4x256xf32, #tpu.memory_space<vmem>>, vector<1x4x256xf32>
    %3 = vector.shape_cast %2 : vector<1x4x256xf32> to vector<4x256xf32>
    %c0_5 = arith.constant 0 : index
    %c0_6 = arith.constant 0 : index
    %4 = vector.load %arg5[%c0_5, %c0_6] : memref<2x4xf32, #tpu.memory_space<vmem>>, vector<2x4xf32>
    %cst = arith.constant dense<0.000000e+00> : vector<2x256xf32>
    %5 = tpu.matmul %4, %1, %cst {dimension_numbers = #tpu.dot_dimension_numbers<[1], [0], [0], [1], [0, 0, 1, 1], [], []>} : vector<2x4xf32>, vector<4x256xf32>, vector<2x256xf32> -> vector<2x256xf32>
    %c0_7 = arith.constant 0 : index
    %c0_8 = arith.constant 0 : index
    %6 = vector.load %arg9[%c0_7, %c0_8] : memref<2x1xf32, #tpu.memory_space<vmem>>, vector<2x1xf32>
    %7 = vector.broadcast %6 : vector<2x1xf32> to vector<2x256xf32>
    %8 = arith.addf %5, %7 : vector<2x256xf32>
    %c0_9 = arith.constant 0 : index
    %c0_10 = arith.constant 0 : index
    %9 = vector.load %arg6[%c0_9, %c0_10] : memref<4x4xf32, #tpu.memory_space<vmem>>, vector<4x4xf32>
    %cst_11 = arith.constant dense<0.000000e+00> : vector<4x256xf32>
    %10 = tpu.matmul %9, %1, %cst_11 {dimension_numbers = #tpu.dot_dimension_numbers<[1], [0], [0], [1], [0, 0, 1, 1], [], []>} : vector<4x4xf32>, vector<4x256xf32>, vector<4x256xf32> -> vector<4x256xf32>
    %c0_12 = arith.constant 0 : index
    %c0_13 = arith.constant 0 : index
    %11 = vector.load %arg10[%c0_12, %c0_13] : memref<4x1xf32, #tpu.memory_space<vmem>>, vector<4x1xf32>
    %12 = vector.broadcast %11 : vector<4x1xf32> to vector<4x256xf32>
    %13 = arith.addf %10, %12 : vector<4x256xf32>
    %c0_14 = arith.constant 0 : index
    %c0_15 = arith.constant 0 : index
    %14 = vector.load %arg4[%c0_14, %c0_15] : memref<2x4xf32, #tpu.memory_space<vmem>>, vector<2x4xf32>
    %cst_16 = arith.constant dense<0.000000e+00> : vector<2x256xf32>
    %15 = tpu.matmul %14, %3, %cst_16 {dimension_numbers = #tpu.dot_dimension_numbers<[1], [0], [0], [1], [0, 0, 1, 1], [], []>} : vector<2x4xf32>, vector<4x256xf32>, vector<2x256xf32> -> vector<2x256xf32>
    %c0_17 = arith.constant 0 : index
    %c0_18 = arith.constant 0 : index
    %16 = vector.load %arg8[%c0_17, %c0_18] : memref<2x1xf32, #tpu.memory_space<vmem>>, vector<2x1xf32>
    %17 = vector.broadcast %16 : vector<2x1xf32> to vector<2x256xf32>
    %18 = arith.addf %15, %17 : vector<2x256xf32>
    %cst_19 = arith.constant dense<0.000000e+00> : vector<256x256xf32>
    %19 = tpu.matmul %8, %18, %cst_19 {dimension_numbers = #tpu.dot_dimension_numbers<[0], [0], [1], [1], [0, 1, 1, 1], [], []>} : vector<2x256xf32>, vector<2x256xf32>, vector<256x256xf32> -> vector<256x256xf32>
    %cst_20 = arith.constant dense<0xFF800000> : vector<256xf32>
    %20 = vector.multi_reduction <maximumf>, %19, %cst_20 [0] : vector<256x256xf32> to vector<256xf32>
    %21 = vector.shape_cast %20 : vector<256xf32> to vector<1x256xf32>
    %22 = vector.broadcast %21 : vector<1x256xf32> to vector<256x256xf32>
    %23 = arith.subf %19, %22 : vector<256x256xf32>
    %24 = math.exp %23 : vector<256x256xf32>
    %cst_21 = arith.constant dense<0.000000e+00> : vector<256xf32>
    %25 = vector.multi_reduction <add>, %24, %cst_21 [0] : vector<256x256xf32> to vector<256xf32>
    %26 = vector.shape_cast %25 : vector<256xf32> to vector<1x256xf32>
    %cst_22 = arith.constant dense<0.000000e+00> : vector<4x256xf32>
    %27 = tpu.matmul %13, %24, %cst_22 {dimension_numbers = #tpu.dot_dimension_numbers<[1], [0], [0], [1], [0, 0, 1, 1], [], []>} : vector<4x256xf32>, vector<256x256xf32>, vector<4x256xf32> -> vector<4x256xf32>
    %28 = tpu.reciprocal %26 : vector<1x256xf32> -> vector<1x256xf32>
    %29 = vector.broadcast %28 : vector<1x256xf32> to vector<4x256xf32>
    %30 = arith.mulf %27, %29 : vector<4x256xf32>
    %c0_23 = arith.constant 0 : index
    %c0_24 = arith.constant 0 : index
    %31 = vector.load %arg7[%c0_23, %c0_24] : memref<4x1xf32, #tpu.memory_space<vmem>>, vector<4x1xf32>
    %32 = vector.broadcast %31 : vector<4x1xf32> to vector<4x256xf32>
    %33 = arith.mulf %30, %32 : vector<4x256xf32>
    %cst_25 = arith.constant dense<0.000000e+00> : vector<256xf32>
    %34 = vector.multi_reduction <add>, %33, %cst_25 [0] : vector<4x256xf32> to vector<256xf32>
    %35 = vector.shape_cast %34 : vector<256xf32> to vector<1x256xf32>
    %c0_26 = arith.constant 0 : index
    %36 = memref.load %arg11[%c0_26] : memref<2xf32, #tpu.memory_space<smem>>
    %37 = vector.broadcast %36 : f32 to vector<1x256xf32>
    %38 = arith.addf %35, %37 : vector<1x256xf32>
    %39 = arith.negf %38 : vector<1x256xf32>
    %40 = math.exp %39 : vector<1x256xf32>
    %cst_27 = arith.constant 1.000000e+00 : f32
    %41 = vector.broadcast %cst_27 : f32 to vector<1x256xf32>
    %42 = arith.addf %41, %40 : vector<1x256xf32>
    %43 = arith.divf %41, %42 : vector<1x256xf32>
    %cst_28 = arith.constant 1.000000e+00 : f32
    %44 = vector.broadcast %cst_28 : f32 to vector<1x256xf32>
    %45 = arith.subf %44, %43 : vector<1x256xf32>
    %46 = vector.broadcast %45 : vector<1x256xf32> to vector<4x256xf32>
    %47 = arith.mulf %30, %46 : vector<4x256xf32>
    %c1 = arith.constant 1 : index
    %48 = memref.load %arg11[%c1] : memref<2xf32, #tpu.memory_space<smem>>
    %49 = vector.broadcast %48 : f32 to vector<4x256xf32>
    %50 = arith.mulf %49, %30 : vector<4x256xf32>
    %51 = arith.addf %50, %3 : vector<4x256xf32>
    %c0_29 = arith.constant 0 : index
    %c0_30 = arith.constant 0 : index
    %c0_31 = arith.constant 0 : index
    %52 = vector.load %arg12[%c0_29, %c0_30, %c0_31] : memref<1x4x256xf32, #tpu.memory_space<vmem>>, vector<1x4x256xf32>
    %53 = vector.shape_cast %52 : vector<1x4x256xf32> to vector<4x256xf32>
    %54 = vector.shape_cast %51 : vector<4x256xf32> to vector<1x4x256xf32>
    tpu.vector_store %arg12[%c0_29, %c0_30, %c0_31], %54 {strides = array<i32>} : memref<1x4x256xf32, #tpu.memory_space<vmem>>, vector<1x4x256xf32>,
    %c0_32 = arith.constant 0 : index
    %c0_33 = arith.constant 0 : index
    %c0_34 = arith.constant 0 : index
    %55 = vector.load %arg13[%c0_32, %c0_33, %c0_34] : memref<1x4x256xf32, #tpu.memory_space<vmem>>, vector<1x4x256xf32>
    %56 = vector.shape_cast %55 : vector<1x4x256xf32> to vector<4x256xf32>
    %57 = vector.shape_cast %47 : vector<4x256xf32> to vector<1x4x256xf32>
    tpu.vector_store %arg13[%c0_32, %c0_33, %c0_34], %57 {strides = array<i32>} : memref<1x4x256xf32, #tpu.memory_space<vmem>>, vector<1x4x256xf32>,
    return
  }
  func.func @transform_0(%arg0: i32, %arg1: i32) -> (i32, i32, i32) {
    %c0_i32 = arith.constant 0 : i32
    %c0_i32_0 = arith.constant 0 : i32
    %c0_i32_1 = arith.constant 0 : i32
    return %arg0, %c0_i32, %c0_i32_0 : i32, i32, i32
  }
  func.func @transform_1(%arg0: i32, %arg1: i32) -> (i32, i32, i32) {
    %c0_i32 = arith.constant 0 : i32
    %c0_i32_0 = arith.constant 0 : i32
    return %arg0, %c0_i32, %arg1 : i32, i32, i32
  }
  func.func @transform_2(%arg0: i32, %arg1: i32) -> (i32, i32) {
    %c0_i32 = arith.constant 0 : i32
    %c0_i32_0 = arith.constant 0 : i32
    %c0_i32_1 = arith.constant 0 : i32
    return %c0_i32, %c0_i32_0 : i32, i32
  }
  func.func @transform_3(%arg0: i32, %arg1: i32) -> (i32, i32) {
    %c0_i32 = arith.constant 0 : i32
    %c0_i32_0 = arith.constant 0 : i32
    %c0_i32_1 = arith.constant 0 : i32
    return %c0_i32, %c0_i32_0 : i32, i32
  }
  func.func @transform_4(%arg0: i32, %arg1: i32) -> (i32, i32) {
    %c0_i32 = arith.constant 0 : i32
    %c0_i32_0 = arith.constant 0 : i32
    %c0_i32_1 = arith.constant 0 : i32
    return %c0_i32, %c0_i32_0 : i32, i32
  }
  func.func @transform_5(%arg0: i32, %arg1: i32) -> (i32, i32) {
    %c0_i32 = arith.constant 0 : i32
    %c0_i32_0 = arith.constant 0 : i32
    %c0_i32_1 = arith.constant 0 : i32
    return %c0_i32, %c0_i32_0 : i32, i32
  }
  func.func @transform_6(%arg0: i32, %arg1: i32) -> (i32, i32) {
    %c0_i32 = arith.constant 0 : i32
    %c0_i32_0 = arith.constant 0 : i32
    %c0_i32_1 = arith.constant 0 : i32
    return %c0_i32, %c0_i32_0 : i32, i32
  }
  func.func @transform_7(%arg0: i32, %arg1: i32) -> (i32, i32) {
    %c0_i32 = arith.constant 0 : i32
    %c0_i32_0 = arith.constant 0 : i32
    %c0_i32_1 = arith.constant 0 : i32
    return %c0_i32, %c0_i32_0 : i32, i32
  }
  func.func @transform_8(%arg0: i32, %arg1: i32) -> (i32, i32) {
    %c0_i32 = arith.constant 0 : i32
    %c0_i32_0 = arith.constant 0 : i32
    %c0_i32_1 = arith.constant 0 : i32
    return %c0_i32, %c0_i32_0 : i32, i32
  }
  func.func @transform_9(%arg0: i32, %arg1: i32) -> i32 {
    %c0_i32 = arith.constant 0 : i32
    %c0_i32_0 = arith.constant 0 : i32
    return %c0_i32 : i32
  }
  func.func @transform_10(%arg0: i32, %arg1: i32) -> (i32, i32, i32) {
    %c0_i32 = arith.constant 0 : i32
    %c0_i32_0 = arith.constant 0 : i32
    return %arg0, %c0_i32, %arg1 : i32, i32, i32
  }
  func.func @transform_11(%arg0: i32, %arg1: i32) -> (i32, i32, i32) {
    %c0_i32 = arith.constant 0 : i32
    %c0_i32_0 = arith.constant 0 : i32
    return %arg0, %c0_i32, %arg1 : i32, i32, i32
  }
}

</mosaic_0001>

<llo_original>
// kernel: tpu_custom_call.1
$region0: #{tpu_custom_call.1}
  #allocation0 [shape = 'u32[]', space=smem, size = 0x4, offset = 0x4, fixed_abs, tag = 'smem constant byte address 0x4 - core index']
  #allocation1 [shape = 'u32[144,128]{1,0:T(1,128)}', space=vmem, size = 0x12000, scoped, tag = 'internal scratch']
  %s0 = inlined_call_operand.vmem [shape: f32[2,4,256], index: 0, kind: input, shape index: {}]
  %s1 = inlined_call_operand.hbm [shape: f32[2,4,256], index: 1, kind: input, shape index: {}]
  %s2 = inlined_call_operand.vmem [shape: f32[2,4], index: 2, kind: input, shape index: {}]
  %s3 = inlined_call_operand.vmem [shape: f32[2,4], index: 3, kind: input, shape index: {}]
  %s4 = inlined_call_operand.vmem [shape: f32[4,4], index: 4, kind: input, shape index: {}]
  %s5 = inlined_call_operand.vmem [shape: f32[4,1], index: 5, kind: input, shape index: {}]
  %s6 = inlined_call_operand.vmem [shape: f32[2,1], index: 6, kind: input, shape index: {}]
  %s7 = inlined_call_operand.vmem [shape: f32[2,1], index: 7, kind: input, shape index: {}]
  %s8 = inlined_call_operand.vmem [shape: f32[4,1], index: 8, kind: input, shape index: {}]
  %s9 = inlined_call_operand.vmem [shape: f32[2], index: 9, kind: input, shape index: {}]
  %s10 = inlined_call_operand.hbm [shape: f32[2,4,256], index: 10, kind: output, shape index: {0}]
  %s11 = inlined_call_operand.hbm [shape: f32[2,4,256], index: 11, kind: output, shape index: {1}]
  %12 = xla_tuple %s10, %s11
  %s13 = sld [smem:[#allocation0]]
  $region89: #{tpu_custom_call.1} parent=0
    _
  %s15 = ssub.s32 1, %s13
  %s16 = scalar_select 0, %s15, %s13
  $region1: #{tpu_custom_call.1} parent=0
    #allocation2 [shape = 'u8[8192]{0}', space=vmem, size = 0x2000, scoped, tag = 'input window, operand 1']
    #allocation3 [shape = 's32[2]{0}', space=sflag, size = 0x8, scoped, tag = 'scoped memory for tpu_custom_call.1']
    #allocation4 [shape = 's32[2]{0}', space=sflag, size = 0x8, scoped, tag = 'scoped memory for tpu_custom_call.1']
    #allocation5 [shape = 's32[2]{0}', space=sflag, size = 0x8, scoped, tag = 'scoped memory for tpu_custom_call.1']
    #allocation6 [shape = 'u8[512]{0}', space=smem, size = 0x200, scoped, tag = 'input window, operand 9, single buffered']
    #allocation7 [shape = 'u8[8192]{0}', space=vmem, size = 0x2000, scoped, tag = 'output window, operand 0']
    #allocation8 [shape = 'u8[8192]{0}', space=vmem, size = 0x2000, scoped, tag = 'output window, operand 1']
    #allocation9 [shape = 's32[2]{0}', space=sflag, size = 0x8, scoped, tag = 'scoped memory for tpu_custom_call.1']
    %17 = vsyncpa [#allocation3], 0
    %s18 = scalar_lea.sflag [#allocation3], 1
    %19 = vsyncpa %s18, 0
    %20 = vsyncpa [#allocation5], 0
    %21 = vsyncpa [#allocation4], 0
    %s22 = scalar_lea.sflag [#allocation4], 1
    %23 = vsyncpa %s22, 0
    %24 = vsyncpa [#allocation9], 0
    %s25 = scalar_lea.sflag [#allocation9], 1
    %26 = vsyncpa %s25, 0
    loop: start=0, step=1, limit=4
    $region2: #{tpu_custom_call.1} parent=1 // loop_pre_header
      _
    $region3: #{tpu_custom_call.1} parent=1 // loop_header
      %s28 = sphi 0, %s32
      %p29 = scmp.ge.s32.totalorder %s28, 4
      %s35 = sphi 0, %s47
      %s36 = sphi 0, %s43
      %s37 = sphi 0, %s35
      %s38 = sphi 0, %s36
      %s39 = sphi 0, %s37
      %s40 = sphi 0, %s38
      %s50 = sphi 0, %s52
      %s53 = sphi 0, %s50
      %s54 = sphi 0, %s53
      %s70 = sphi 0, %s54
      %s78 = sphi 0, %s80
      %s81 = sphi 0, %s78
      %s82 = sphi 0, %s81
      %s98 = sphi 0, %s82
      %s102 = sphi 0, %s102
      %s104 = sphi 0, %s102
      %s105 = sphi 0, %s104
      %s119 = sphi 0, %s105
      %s123 = sphi 0, %s123
      %s125 = sphi 0, %s123
      %s126 = sphi 0, %s125
      %s140 = sphi 0, %s126
      %s144 = sphi 0, %s144
      %s146 = sphi 0, %s144
      %s147 = sphi 0, %s146
      %s161 = sphi 0, %s147
      %s165 = sphi 0, %s165
      %s167 = sphi 0, %s165
      %s168 = sphi 0, %s167
      %s182 = sphi 0, %s168
      %s186 = sphi 0, %s186
      %s188 = sphi 0, %s186
      %s189 = sphi 0, %s188
      %s203 = sphi 0, %s189
      %s207 = sphi 0, %s207
      %s209 = sphi 0, %s207
      %s210 = sphi 0, %s209
      %s224 = sphi 0, %s210
      %s228 = sphi 0, %s228
      %s230 = sphi 0, %s228
      %s231 = sphi 0, %s230
      %s245 = sphi 0, %s231
      %s249 = sphi 0, %s249
      %s251 = sphi 0, %s249
      %s252 = sphi 0, %s251
      %s266 = sphi 0, %s252
      %s274 = sphi 0, %s276
      %s277 = sphi 0, %s274
      %s278 = sphi 0, %s277
      %s294 = sphi 0, %s278
      %s302 = sphi 0, %s304
      %s305 = sphi 0, %s302
      %s306 = sphi 0, %s305
      %s322 = sphi 0, %s306
    $region4: #{tpu_custom_call.1} parent=1 // loop_header_branch
      %31 = sbr.rel (%p29) target = $region8
    $region5: #{tpu_custom_call.1} parent=1 // loop_body
      %s33 = ssub.s32 %s28, 1
      %s34 = ssub.s32 %s28, 2
      %s41 = sadd.s32 1, %s36
      %p42 = scmp.ge.s32.totalorder %s41, 1
      %s43 = scalar_select %p42, 0, %s41
      %s44 = sadd.s32 1, %s35
      %s45 = scalar_select %p42, %s44, %s35
      %p46 = scmp.ge.s32.totalorder %s45, 2
      %s47 = scalar_select %p46, 0, %s45
      %s48 = ssub.s32 %s35, %s47
      %p49 = scmp.eq.s32.totalorder %s48, 0
      %s51 = sadd.s32 %s50, 1
      %s52 = scalar_select %p49, %s50, %s51
      %p55 = pneg %p49
      %p56 = scmp.eq.s32.totalorder %s28, 1
      %p57 = por %p55, %p56
      %p58 = scmp.ne.s32.totalorder %s50, %s53
      %p59 = scmp.eq.s32.totalorder %s28, 0
      %p60 = por %p58, %p59
      %p61 = scmp.ne.s32.totalorder %s50, %s53
      %p62 = scmp.eq.s32.totalorder %s33, 1
      %p63 = por %p61, %p62
      %p64 = scmp.ne.s32.totalorder %s53, %s54
      %p65 = scmp.eq.s32.totalorder %s33, 0
      %p66 = por %p64, %p65
      %p67 = scmp.ne.s32.totalorder %s53, %s54
      %p68 = scmp.eq.s32.totalorder %s34, 1
      %p69 = por %p67, %p68
      %p71 = scmp.ne.s32.totalorder %s54, %s70
      %p72 = scmp.eq.s32.totalorder %s34, 0
      %p73 = por %p71, %p72
      %s74 = ssub.s32 %s35, %s47
      %s75 = ssub.s32 %s36, %s43
      %s76 = sor.u32 %s74, %s75
      %p77 = scmp.eq.s32.totalorder %s76, 0
      %s79 = sadd.s32 %s78, 1
      %s80 = scalar_select %p77, %s78, %s79
      %p83 = pneg %p77
      %p84 = scmp.eq.s32.totalorder %s28, 1
      %p85 = por %p83, %p84
      %p86 = scmp.ne.s32.totalorder %s78, %s81
      %p87 = scmp.eq.s32.totalorder %s28, 0
      %p88 = por %p86, %p87
      %p89 = scmp.ne.s32.totalorder %s78, %s81
      %p90 = scmp.eq.s32.totalorder %s33, 1
      %p91 = por %p89, %p90
      %p92 = scmp.ne.s32.totalorder %s81, %s82
      %p93 = scmp.eq.s32.totalorder %s33, 0
      %p94 = por %p92, %p93
      %p95 = scmp.ne.s32.totalorder %s81, %s82
      %p96 = scmp.eq.s32.totalorder %s34, 1
      %p97 = por %p95, %p96
      %p99 = scmp.ne.s32.totalorder %s82, %s98
      %p100 = scmp.eq.s32.totalorder %s34, 0
      %p101 = por %p99, %p100
      %s103 = sadd.s32 %s102, 1
      %p106 = scmp.eq.s32.totalorder %s28, 1
      %p107 = scmp.ne.s32.totalorder %s102, %s104
      %p108 = scmp.eq.s32.totalorder %s28, 0
      %p109 = por %p107, %p108
      %p110 = scmp.ne.s32.totalorder %s102, %s104
      %p111 = scmp.eq.s32.totalorder %s33, 1
      %p112 = por %p110, %p111
      %p113 = scmp.ne.s32.totalorder %s104, %s105
      %p114 = scmp.eq.s32.totalorder %s33, 0
      %p115 = por %p113, %p114
      %p116 = scmp.ne.s32.totalorder %s104, %s105
      %p117 = scmp.eq.s32.totalorder %s34, 1
      %p118 = por %p116, %p117
      %p120 = scmp.ne.s32.totalorder %s105, %s119
      %p121 = scmp.eq.s32.totalorder %s34, 0
      %p122 = por %p120, %p121
      %s124 = sadd.s32 %s123, 1
      %p127 = scmp.eq.s32.totalorder %s28, 1
      %p128 = scmp.ne.s32.totalorder %s123, %s125
      %p129 = scmp.eq.s32.totalorder %s28, 0
      %p130 = por %p128, %p129
      %p131 = scmp.ne.s32.totalorder %s123, %s125
      %p132 = scmp.eq.s32.totalorder %s33, 1
      %p133 = por %p131, %p132
      %p134 = scmp.ne.s32.totalorder %s125, %s126
      %p135 = scmp.eq.s32.totalorder %s33, 0
      %p136 = por %p134, %p135
      %p137 = scmp.ne.s32.totalorder %s125, %s126
      %p138 = scmp.eq.s32.totalorder %s34, 1
      %p139 = por %p137, %p138
      %p141 = scmp.ne.s32.totalorder %s126, %s140
      %p142 = scmp.eq.s32.totalorder %s34, 0
      %p143 = por %p141, %p142
      %s145 = sadd.s32 %s144, 1
      %p148 = scmp.eq.s32.totalorder %s28, 1
      %p149 = scmp.ne.s32.totalorder %s144, %s146
      %p150 = scmp.eq.s32.totalorder %s28, 0
      %p151 = por %p149, %p150
      %p152 = scmp.ne.s32.totalorder %s144, %s146
      %p153 = scmp.eq.s32.totalorder %s33, 1
      %p154 = por %p152, %p153
      %p155 = scmp.ne.s32.totalorder %s146, %s147
      %p156 = scmp.eq.s32.totalorder %s33, 0
      %p157 = por %p155, %p156
      %p158 = scmp.ne.s32.totalorder %s146, %s147
      %p159 = scmp.eq.s32.totalorder %s34, 1
      %p160 = por %p158, %p159
      %p162 = scmp.ne.s32.totalorder %s147, %s161
      %p163 = scmp.eq.s32.totalorder %s34, 0
      %p164 = por %p162, %p163
      %s166 = sadd.s32 %s165, 1
      %p169 = scmp.eq.s32.totalorder %s28, 1
      %p170 = scmp.ne.s32.totalorder %s165, %s167
      %p171 = scmp.eq.s32.totalorder %s28, 0
      %p172 = por %p170, %p171
      %p173 = scmp.ne.s32.totalorder %s165, %s167
      %p174 = scmp.eq.s32.totalorder %s33, 1
      %p175 = por %p173, %p174
      %p176 = scmp.ne.s32.totalorder %s167, %s168
      %p177 = scmp.eq.s32.totalorder %s33, 0
      %p178 = por %p176, %p177
      %p179 = scmp.ne.s32.totalorder %s167, %s168
      %p180 = scmp.eq.s32.totalorder %s34, 1
      %p181 = por %p179, %p180
      %p183 = scmp.ne.s32.totalorder %s168, %s182
      %p184 = scmp.eq.s32.totalorder %s34, 0
      %p185 = por %p183, %p184
      %s187 = sadd.s32 %s186, 1
      %p190 = scmp.eq.s32.totalorder %s28, 1
      %p191 = scmp.ne.s32.totalorder %s186, %s188
      %p192 = scmp.eq.s32.totalorder %s28, 0
      %p193 = por %p191, %p192
      %p194 = scmp.ne.s32.totalorder %s186, %s188
      %p195 = scmp.eq.s32.totalorder %s33, 1
      %p196 = por %p194, %p195
      %p197 = scmp.ne.s32.totalorder %s188, %s189
      %p198 = scmp.eq.s32.totalorder %s33, 0
      %p199 = por %p197, %p198
      %p200 = scmp.ne.s32.totalorder %s188, %s189
      %p201 = scmp.eq.s32.totalorder %s34, 1
      %p202 = por %p200, %p201
      %p204 = scmp.ne.s32.totalorder %s189, %s203
      %p205 = scmp.eq.s32.totalorder %s34, 0
      %p206 = por %p204, %p205
      %s208 = sadd.s32 %s207, 1
      %p211 = scmp.eq.s32.totalorder %s28, 1
      %p212 = scmp.ne.s32.totalorder %s207, %s209
      %p213 = scmp.eq.s32.totalorder %s28, 0
      %p214 = por %p212, %p213
      %p215 = scmp.ne.s32.totalorder %s207, %s209
      %p216 = scmp.eq.s32.totalorder %s33, 1
      %p217 = por %p215, %p216
      %p218 = scmp.ne.s32.totalorder %s209, %s210
      %p219 = scmp.eq.s32.totalorder %s33, 0
      %p220 = por %p218, %p219
      %p221 = scmp.ne.s32.totalorder %s209, %s210
      %p222 = scmp.eq.s32.totalorder %s34, 1
      %p223 = por %p221, %p222
      %p225 = scmp.ne.s32.totalorder %s210, %s224
      %p226 = scmp.eq.s32.totalorder %s34, 0
      %p227 = por %p225, %p226
      %s229 = sadd.s32 %s228, 1
      %p232 = scmp.eq.s32.totalorder %s28, 1
      %p233 = scmp.ne.s32.totalorder %s228, %s230
      %p234 = scmp.eq.s32.totalorder %s28, 0
      %p235 = por %p233, %p234
      %p236 = scmp.ne.s32.totalorder %s228, %s230
      %p237 = scmp.eq.s32.totalorder %s33, 1
      %p238 = por %p236, %p237
      %p239 = scmp.ne.s32.totalorder %s230, %s231
      %p240 = scmp.eq.s32.totalorder %s33, 0
      %p241 = por %p239, %p240
      %p242 = scmp.ne.s32.totalorder %s230, %s231
      %p243 = scmp.eq.s32.totalorder %s34, 1
      %p244 = por %p242, %p243
      %p246 = scmp.ne.s32.totalorder %s231, %s245
      %p247 = scmp.eq.s32.totalorder %s34, 0
      %p248 = por %p246, %p247
      %s250 = sadd.s32 %s249, 1
      %p253 = scmp.eq.s32.totalorder %s28, 1
      %p254 = scmp.ne.s32.totalorder %s249, %s251
      %p255 = scmp.eq.s32.totalorder %s28, 0
      %p256 = por %p254, %p255
      %p257 = scmp.ne.s32.totalorder %s249, %s251
      %p258 = scmp.eq.s32.totalorder %s33, 1
      %p259 = por %p257, %p258
      %p260 = scmp.ne.s32.totalorder %s251, %s252
      %p261 = scmp.eq.s32.totalorder %s33, 0
      %p262 = por %p260, %p261
      %p263 = scmp.ne.s32.totalorder %s251, %s252
      %p264 = scmp.eq.s32.totalorder %s34, 1
      %p265 = por %p263, %p264
      %p267 = scmp.ne.s32.totalorder %s252, %s266
      %p268 = scmp.eq.s32.totalorder %s34, 0
      %p269 = por %p267, %p268
      %s270 = ssub.s32 %s35, %s47
      %s271 = ssub.s32 %s36, %s43
      %s272 = sor.u32 %s270, %s271
      %p273 = scmp.eq.s32.totalorder %s272, 0
      %s275 = sadd.s32 %s274, 1
      %s276 = scalar_select %p273, %s274, %s275
      %p279 = pneg %p273
      %p280 = scmp.eq.s32.totalorder %s28, 1
      %p281 = por %p279, %p280
      %p282 = scmp.ne.s32.totalorder %s274, %s277
      %p283 = scmp.eq.s32.totalorder %s28, 0
      %p284 = por %p282, %p283
      %p285 = scmp.ne.s32.totalorder %s274, %s277
      %p286 = scmp.eq.s32.totalorder %s33, 1
      %p287 = por %p285, %p286
      %p288 = scmp.ne.s32.totalorder %s277, %s278
      %p289 = scmp.eq.s32.totalorder %s33, 0
      %p290 = por %p288, %p289
      %p291 = scmp.ne.s32.totalorder %s277, %s278
      %p292 = scmp.eq.s32.totalorder %s34, 1
      %p293 = por %p291, %p292
      %p295 = scmp.ne.s32.totalorder %s278, %s294
      %p296 = scmp.eq.s32.totalorder %s34, 0
      %p297 = por %p295, %p296
      %s298 = ssub.s32 %s35, %s47
      %s299 = ssub.s32 %s36, %s43
      %s300 = sor.u32 %s298, %s299
      %p301 = scmp.eq.s32.totalorder %s300, 0
      %s303 = sadd.s32 %s302, 1
      %s304 = scalar_select %p301, %s302, %s303
      %p307 = pneg %p301
      %p308 = scmp.eq.s32.totalorder %s28, 1
      %p309 = por %p307, %p308
      %p310 = scmp.ne.s32.totalorder %s302, %s305
      %p311 = scmp.eq.s32.totalorder %s28, 0
      %p312 = por %p310, %p311
      %p313 = scmp.ne.s32.totalorder %s302, %s305
      %p314 = scmp.eq.s32.totalorder %s33, 1
      %p315 = por %p313, %p314
      %p316 = scmp.ne.s32.totalorder %s305, %s306
      %p317 = scmp.eq.s32.totalorder %s33, 0
      %p318 = por %p316, %p317
      %p319 = scmp.ne.s32.totalorder %s305, %s306
      %p320 = scmp.eq.s32.totalorder %s34, 1
      %p321 = por %p319, %p320
      %p323 = scmp.ne.s32.totalorder %s306, %s322
      %p324 = scmp.eq.s32.totalorder %s34, 0
      %p325 = por %p323, %p324
      %p326 = scmp.le.s32.totalorder 1, %s28
      %p327 = scmp.lt.s32.totalorder %s28, 3
      %p328 = pnand %p326, %p327
      %p329 = pneg %p328
      // Predicated region
      $region9: #{tpu_custom_call.1} parent=5 // pred_check
        _
      $region10: #{tpu_custom_call.1} parent=5 // pred_check_branch
        %331 = sbr.rel (%p328) target = $region12
      $region11: #{tpu_custom_call.1} parent=5 // pred_region
        %s332 = ssub.s32 %s28, 1
        // Predicated region
        $region13: #{tpu_custom_call.1} parent=11 // pred_check
          %p333 = pneg %p115
        $region14: #{tpu_custom_call.1} parent=11 // pred_check_branch
          %335 = sbr.rel (%p333) target = $region16
        $region15: #{tpu_custom_call.1} parent=11 // pred_region
          _
        $region16: #{tpu_custom_call.1} parent=11 // pred_fallthru
          _
        // Predicated region
        $region17: #{tpu_custom_call.1} parent=11 // pred_check
          %p336 = pneg %p136
        $region18: #{tpu_custom_call.1} parent=11 // pred_check_branch
          %338 = sbr.rel (%p336) target = $region20
        $region19: #{tpu_custom_call.1} parent=11 // pred_region
          _
        $region20: #{tpu_custom_call.1} parent=11 // pred_fallthru
          _
        // Predicated region
        $region21: #{tpu_custom_call.1} parent=11 // pred_check
          %p339 = pneg %p157
        $region22: #{tpu_custom_call.1} parent=11 // pred_check_branch
          %341 = sbr.rel (%p339) target = $region24
        $region23: #{tpu_custom_call.1} parent=11 // pred_region
          _
        $region24: #{tpu_custom_call.1} parent=11 // pred_fallthru
          _
        // Predicated region
        $region25: #{tpu_custom_call.1} parent=11 // pred_check
          %p342 = pneg %p178
        $region26: #{tpu_custom_call.1} parent=11 // pred_check_branch
          %344 = sbr.rel (%p342) target = $region28
        $region27: #{tpu_custom_call.1} parent=11 // pred_region
          _
        $region28: #{tpu_custom_call.1} parent=11 // pred_fallthru
          _
        // Predicated region
        $region29: #{tpu_custom_call.1} parent=11 // pred_check
          %p345 = pneg %p199
        $region30: #{tpu_custom_call.1} parent=11 // pred_check_branch
          %347 = sbr.rel (%p345) target = $region32
        $region31: #{tpu_custom_call.1} parent=11 // pred_region
          _
        $region32: #{tpu_custom_call.1} parent=11 // pred_fallthru
          _
        // Predicated region
        $region33: #{tpu_custom_call.1} parent=11 // pred_check
          %p348 = pneg %p220
        $region34: #{tpu_custom_call.1} parent=11 // pred_check_branch
          %350 = sbr.rel (%p348) target = $region36
        $region35: #{tpu_custom_call.1} parent=11 // pred_region
          _
        $region36: #{tpu_custom_call.1} parent=11 // pred_fallthru
          _
        // Predicated region
        $region37: #{tpu_custom_call.1} parent=11 // pred_check
          %p351 = pneg %p241
        $region38: #{tpu_custom_call.1} parent=11 // pred_check_branch
          %353 = sbr.rel (%p351) target = $region40
        $region39: #{tpu_custom_call.1} parent=11 // pred_region
          _
        $region40: #{tpu_custom_call.1} parent=11 // pred_fallthru
          _
        // Predicated region
        $region41: #{tpu_custom_call.1} parent=11 // pred_check
          %p354 = pneg %p262
        $region42: #{tpu_custom_call.1} parent=11 // pred_check_branch
          %356 = sbr.rel (%p354) target = $region44
        $region43: #{tpu_custom_call.1} parent=11 // pred_region
          %s358 = ssub.s32 16, 16
          %359 = vsyncadd [#allocation5], %s358
          %s361 = sshll.u32 %s9, 4
          %s362 = int_to_ptr.vmem [resolvable:$true] %s361
          %364 = dma.vmem_to_smem %s362, 16, [#allocation6], [#allocation5]
        $region44: #{tpu_custom_call.1} parent=11 // pred_fallthru
          _
      $region12: #{tpu_custom_call.1} parent=5 // pred_fallthru
        _
      %p365 = scmp.lt.s32.totalorder %s28, 2
      // Predicated region
      $region45: #{tpu_custom_call.1} parent=5 // pred_check
        %p366 = pneg %p365
      $region46: #{tpu_custom_call.1} parent=5 // pred_check_branch
        %368 = sbr.rel (%p366) target = $region48
      $region47: #{tpu_custom_call.1} parent=5 // pred_region
        // Predicated region
        $region49: #{tpu_custom_call.1} parent=47 // pred_check
          %p369 = pneg %p60
        $region50: #{tpu_custom_call.1} parent=47 // pred_check_branch
          %371 = sbr.rel (%p369) target = $region52
        $region51: #{tpu_custom_call.1} parent=47 // pred_region
          %p372 = scmp.lt.s32.totalorder %s35, 1
          %s373 = scalar_select %p372, %s35, 1
          %s374 = smul.addr %s373, 2
          %s375 = smul.addr %s374, 4
          %s376 = scalar_lea.vmem %s0, %s375
        $region52: #{tpu_custom_call.1} parent=47 // pred_fallthru
          _
        // Predicated region
        $region53: #{tpu_custom_call.1} parent=47 // pred_check
          %p377 = pneg %p88
        $region54: #{tpu_custom_call.1} parent=47 // pred_check_branch
          %379 = sbr.rel (%p377) target = $region56
        $region55: #{tpu_custom_call.1} parent=47 // pred_region
          %s380 = sand.u32 %s78, 1
          %s381 = scalar_lea.sflag [#allocation3], %s380
          %s382 = sand.u32 %s78, 1
          %s383 = smul.addr %s382, 8
          %s384 = scalar_lea.vmem [#allocation2], %s383
          %s385 = smul.u32 2, %s36
          %s387 = ssub.s32 128, 128
          %388 = vsyncadd %s381, %s387
          %s389 = smul.addr %s35, 2
          %s390 = sadd.s32 %s385, %s389
          %s391 = smul.addr %s390, 64
          %s392 = scalar_lea.hbm %s1, %s391
          %s394 = sshll.u32 %s384, 4
          %s395 = int_to_ptr.vmem [resolvable:$true] %s394
          %397 = dma.hbm_to_vmem [thread:$0]  %s392, 128, %s395, %s381
        $region56: #{tpu_custom_call.1} parent=47 // pred_fallthru
          _
      $region48: #{tpu_custom_call.1} parent=5 // pred_fallthru
        _
      %p398 = scmp.le.s32.totalorder 1, %s28
      %p399 = scmp.lt.s32.totalorder %s28, 3
      %p400 = pnand %p398, %p399
      %p401 = pneg %p400
      // Predicated region
      $region57: #{tpu_custom_call.1} parent=5 // pred_check
        _
      $region58: #{tpu_custom_call.1} parent=5 // pred_check_branch
        %403 = sbr.rel (%p400) target = $region60
      $region59: #{tpu_custom_call.1} parent=5 // pred_region
        %s404 = ssub.s32 %s28, 1
        %s405 = sand.u32 %s81, 1
        %s406 = scalar_lea.sflag [#allocation3], %s405
        %s407 = sand.u32 %s81, 1
        %s408 = smul.addr %s407, 8
        %s409 = scalar_lea.vmem [#allocation2], %s408
        // Predicated region
        $region61: #{tpu_custom_call.1} parent=59 // pred_check
          %p410 = pneg %p94
        $region62: #{tpu_custom_call.1} parent=59 // pred_check_branch
          %412 = sbr.rel (%p410) target = $region64
        $region63: #{tpu_custom_call.1} parent=59 // pred_region
          %413 = dma.done %s406, 128
        $region64: #{tpu_custom_call.1} parent=59 // pred_fallthru
          _
        // Predicated region
        $region65: #{tpu_custom_call.1} parent=59 // pred_check
          %p414 = pneg %p262
        $region66: #{tpu_custom_call.1} parent=59 // pred_check_branch
          %416 = sbr.rel (%p414) target = $region68
        $region67: #{tpu_custom_call.1} parent=59 // pred_region
          %417 = dma.done [#allocation5], 16
        $region68: #{tpu_custom_call.1} parent=59 // pred_fallthru
          _
        %418 = sfence
        %p419 = scmp.lt.s32.totalorder %s37, 1
        %s420 = scalar_select %p419, %s37, 1
        %s421 = smul.addr %s420, 2
        %s422 = smul.addr %s421, 4
        %s423 = scalar_lea.vmem %s0, %s422
        %p424 = pneg %p66
        %p425 = pneg %p63
        %s426 = sand.u32 %s81, 1
        %s427 = scalar_lea.sflag [#allocation3], %s426
        %s428 = sand.u32 %s81, 1
        %s429 = smul.addr %s428, 8
        %s430 = scalar_lea.vmem [#allocation2], %s429
        %p431 = pneg %p94
        %p432 = pneg %p91
        %p433 = pneg %p115
        %p434 = pneg %p112
        %p435 = pneg %p136
        %p436 = pneg %p133
        %p437 = pneg %p157
        %p438 = pneg %p154
        %p439 = pneg %p178
        %p440 = pneg %p175
        %p441 = pneg %p199
        %p442 = pneg %p196
        %p443 = pneg %p220
        %p444 = pneg %p217
        %p445 = pneg %p241
        %p446 = pneg %p238
        %p447 = pneg %p262
        %p448 = pneg %p259
        %p449 = pneg %p290
        %p450 = pneg %p287
        %s451 = sand.u32 %s277, 1
        %s452 = scalar_lea.sflag [#allocation4], %s451
        %s453 = sand.u32 %s277, 1
        %s454 = smul.addr %s453, 8
        %s455 = scalar_lea.vmem [#allocation7], %s454
        %p456 = pneg %p318
        %p457 = pneg %p315
        %s458 = sand.u32 %s305, 1
        %s459 = scalar_lea.sflag [#allocation9], %s458
        %s460 = sand.u32 %s305, 1
        %s461 = smul.addr %s460, 8
        %s462 = scalar_lea.vmem [#allocation8], %s461
        %p463 = scmp.lt.s32.totalorder %s37, 1
        %s464 = scalar_select %p463, %s37, 1
        %s465 = smul.addr %s464, 2
        %s466 = smul.addr %s465, 4
        %s467 = scalar_lea.vmem %s0, %s466
        %s468 = smul.u32 2, %s38
        %s469 = smul.u32 2, %s38
        %s470 = smul.u32 2, %s38
        %v471 = vld [vmem:[%s467] sm:$0xff]
        %v472 = vld [vmem:[%s409] sm:$0xff]
        %v473 = vld [vmem:[%s3] sm:$0x3]
        %v474 = vld [vmem:[%s7] sm:$0x3]
        %476 = vset.pattern.permute.xlu0 0
        %477 = vperm.xlu0 %476, %v474
        %v478 = vpop.permute.xlu0 %477
        %v481 = vcombine.high %v471, %v471
        %vm482 = vcmask 31744
        %v484 = vsel %vm482, %v473, 0
        %vm486 = vcmask 1043456
        %v487 = vsel %vm486, %v471, 0
        %v489 = vsel %vm486, %v481, 0
        %491 = vmatprep.subr.mxu0 %v489
        %492 = vmatpush1.msra.mxu0 %v487
        %493 = vmatprep.subr.mxu0 0.0
        %494 = vmatpush1.msra.mxu0 0.0
        %495 = vmatprep.subr.mxu0 0.0
        %496 = vmatpush1.msra.mxu0 0.0
        %497 = vmatprep.subr.mxu0 0.0
        %498 = vmatpush1.msra.mxu0 0.0
        %499 = vmatprep.subr.mxu0 0.0
        %500 = vmatpush1.msra.mxu0 0.0
        %501 = vmatprep.subr.mxu0 0.0
        %502 = vmatpush1.msra.mxu0 0.0
        %503 = vmatprep.subr.mxu0 0.0
        %504 = vmatpush1.msra.mxu0 0.0
        %505 = vmatprep.subr.mxu0 0.0
        %506 = vmatpush1.msra.mxu0 0.0
        %507 = vmatprep.subr.mxu0 0.0
        %508 = vmatpush1.msra.mxu0 0.0
        %509 = vmatprep.subr.mxu0 0.0
        %510 = vmatpush1.msra.mxu0 0.0
        %511 = vmatprep.subr.mxu0 0.0
        %512 = vmatpush1.msra.mxu0 0.0
        %513 = vmatprep.subr.mxu0 0.0
        %514 = vmatpush1.msra.mxu0 0.0
        %515 = vmatprep.subr.mxu0 0.0
        %516 = vmatpush1.msra.mxu0 0.0
        %517 = vmatprep.subr.mxu0 0.0
        %518 = vmatpush1.msra.mxu0 0.0
        %519 = vmatprep.subr.mxu0 0.0
        %520 = vmatpush1.msra.mxu0 0.0
        %521 = vmatprep.subr.mxu0 0.0
        %522 = vmatpush1.msra.mxu0 0.0
        %523 = vmatprep.subr.mxu0 0.0
        %524 = vmatpush1.msra.mxu0 0.0
        %525 = vmatprep.subr.mxu0 0.0
        %526 = vmatpush1.msra.mxu0 0.0
        %527 = vmatprep.subr.mxu0 0.0
        %528 = vmatpush1.msra.mxu0 0.0
        %529 = vmatprep.subr.mxu0 0.0
        %530 = vmatpush1.msra.mxu0 0.0
        %531 = vmatprep.subr.mxu0 0.0
        %532 = vmatpush1.msra.mxu0 0.0
        %533 = vmatprep.subr.mxu0 0.0
        %534 = vmatpush1.msra.mxu0 0.0
        %535 = vmatprep.subr.mxu0 0.0
        %536 = vmatpush1.msra.mxu0 0.0
        %537 = vmatprep.subr.mxu0 0.0
        %538 = vmatpush1.msra.mxu0 0.0
        %539 = vmatprep.subr.mxu0 0.0
        %540 = vmatpush1.msra.mxu0 0.0
        %541 = vmatprep.subr.mxu0 0.0
        %542 = vmatpush1.msra.mxu0 0.0
        %543 = vmatprep.subr.mxu0 0.0
        %544 = vmatpush1.msra.mxu0 0.0
        %545 = vmatprep.subr.mxu0 0.0
        %546 = vmatpush1.msra.mxu0 0.0
        %547 = vmatprep.subr.mxu0 0.0
        %548 = vmatpush1.msra.mxu0 0.0
        %549 = vmatprep.subr.mxu0 0.0
        %550 = vmatpush1.msra.mxu0 0.0
        %551 = vmatprep.subr.mxu0 0.0
        %552 = vmatpush1.msra.mxu0 0.0
        %553 = vmatprep.subr.mxu0 0.0
        %554 = vmatpush1.msra.mxu0 0.0
        %555 = vmatprep.mubr.f32.mxu0 0.0
        %556 = vmatmul.mubr.f32.gmra.mrb[0].mxu0 %v484
        %v557 = vpop.f32.mrb[0].mxu0
        %v558 = vadd.f32 %v478, %v557
        %v559 = vpop.f32.mrb[0].mxu0
        %v560 = vadd.f32 %v478, %v559
        %561 = vdwg.mxu0
        %v562 = vld [vmem:[%s4] sm:$0xf]
        %v563 = vld [vmem:[%s8] sm:$0xf]
        %565 = vset.pattern.permute.xlu0 0
        %566 = vperm.xlu0 %565, %v563
        %v567 = vpop.permute.xlu0 %566
        %v570 = vsel %vm482, %v562, 0
        %572 = vmatprep.subr.mxu0 %v489
        %573 = vmatpush1.msra.mxu0 %v487
        %574 = vmatprep.subr.mxu0 0.0
        %575 = vmatpush1.msra.mxu0 0.0
        %576 = vmatprep.subr.mxu0 0.0
        %577 = vmatpush1.msra.mxu0 0.0
        %578 = vmatprep.subr.mxu0 0.0
        %579 = vmatpush1.msra.mxu0 0.0
        %580 = vmatprep.subr.mxu0 0.0
        %581 = vmatpush1.msra.mxu0 0.0
        %582 = vmatprep.subr.mxu0 0.0
        %583 = vmatpush1.msra.mxu0 0.0
        %584 = vmatprep.subr.mxu0 0.0
        %585 = vmatpush1.msra.mxu0 0.0
        %586 = vmatprep.subr.mxu0 0.0
        %587 = vmatpush1.msra.mxu0 0.0
        %588 = vmatprep.subr.mxu0 0.0
        %589 = vmatpush1.msra.mxu0 0.0
        %590 = vmatprep.subr.mxu0 0.0
        %591 = vmatpush1.msra.mxu0 0.0
        %592 = vmatprep.subr.mxu0 0.0
        %593 = vmatpush1.msra.mxu0 0.0
        %594 = vmatprep.subr.mxu0 0.0
        %595 = vmatpush1.msra.mxu0 0.0
        %596 = vmatprep.subr.mxu0 0.0
        %597 = vmatpush1.msra.mxu0 0.0
        %598 = vmatprep.subr.mxu0 0.0
        %599 = vmatpush1.msra.mxu0 0.0
        %600 = vmatprep.subr.mxu0 0.0
        %601 = vmatpush1.msra.mxu0 0.0
        %602 = vmatprep.subr.mxu0 0.0
        %603 = vmatpush1.msra.mxu0 0.0
        %604 = vmatprep.subr.mxu0 0.0
        %605 = vmatpush1.msra.mxu0 0.0
        %606 = vmatprep.subr.mxu0 0.0
        %607 = vmatpush1.msra.mxu0 0.0
        %608 = vmatprep.subr.mxu0 0.0
        %609 = vmatpush1.msra.mxu0 0.0
        %610 = vmatprep.subr.mxu0 0.0
        %611 = vmatpush1.msra.mxu0 0.0
        %612 = vmatprep.subr.mxu0 0.0
        %613 = vmatpush1.msra.mxu0 0.0
        %614 = vmatprep.subr.mxu0 0.0
        %615 = vmatpush1.msra.mxu0 0.0
        %616 = vmatprep.subr.mxu0 0.0
        %617 = vmatpush1.msra.mxu0 0.0
        %618 = vmatprep.subr.mxu0 0.0
        %619 = vmatpush1.msra.mxu0 0.0
        %620 = vmatprep.subr.mxu0 0.0
        %621 = vmatpush1.msra.mxu0 0.0
        %622 = vmatprep.subr.mxu0 0.0
        %623 = vmatpush1.msra.mxu0 0.0
        %624 = vmatprep.subr.mxu0 0.0
        %625 = vmatpush1.msra.mxu0 0.0
        %626 = vmatprep.subr.mxu0 0.0
        %627 = vmatpush1.msra.mxu0 0.0
        %628 = vmatprep.subr.mxu0 0.0
        %629 = vmatpush1.msra.mxu0 0.0
        %630 = vmatprep.subr.mxu0 0.0
        %631 = vmatpush1.msra.mxu0 0.0
        %632 = vmatprep.subr.mxu0 0.0
        %633 = vmatpush1.msra.mxu0 0.0
        %634 = vmatprep.subr.mxu0 0.0
        %635 = vmatpush1.msra.mxu0 0.0
        %636 = vmatprep.mubr.f32.mxu0 0.0
        %637 = vmatmul.mubr.f32.gmra.mrb[0].mxu0 %v570
        %v638 = vpop.f32.mrb[0].mxu0
        %v639 = vadd.f32 %v567, %v638
        %v640 = vpop.f32.mrb[0].mxu0
        %v641 = vadd.f32 %v567, %v640
        %642 = vdwg.mxu0
        %v643 = vld [vmem:[%s2] sm:$0x3]
        %v644 = vld [vmem:[%s6] sm:$0x3]
        %646 = vset.pattern.permute.xlu0 0
        %647 = vperm.xlu0 %646, %v644
        %v648 = vpop.permute.xlu0 %647
        %v651 = vcombine.high %v472, %v472
        %v653 = vsel %vm482, %v643, 0
        %v655 = vsel %vm486, %v472, 0
        %v657 = vsel %vm486, %v651, 0
        %659 = vmatprep.subr.mxu0 %v657
        %660 = vmatpush1.msra.mxu0 %v655
        %661 = vmatprep.subr.mxu0 0.0
        %662 = vmatpush1.msra.mxu0 0.0
        %663 = vmatprep.subr.mxu0 0.0
        %664 = vmatpush1.msra.mxu0 0.0
        %665 = vmatprep.subr.mxu0 0.0
        %666 = vmatpush1.msra.mxu0 0.0
        %667 = vmatprep.subr.mxu0 0.0
        %668 = vmatpush1.msra.mxu0 0.0
        %669 = vmatprep.subr.mxu0 0.0
        %670 = vmatpush1.msra.mxu0 0.0
        %671 = vmatprep.subr.mxu0 0.0
        %672 = vmatpush1.msra.mxu0 0.0
        %673 = vmatprep.subr.mxu0 0.0
        %674 = vmatpush1.msra.mxu0 0.0
        %675 = vmatprep.subr.mxu0 0.0
        %676 = vmatpush1.msra.mxu0 0.0
        %677 = vmatprep.subr.mxu0 0.0
        %678 = vmatpush1.msra.mxu0 0.0
        %679 = vmatprep.subr.mxu0 0.0
        %680 = vmatpush1.msra.mxu0 0.0
        %681 = vmatprep.subr.mxu0 0.0
        %682 = vmatpush1.msra.mxu0 0.0
        %683 = vmatprep.subr.mxu0 0.0
        %684 = vmatpush1.msra.mxu0 0.0
        %685 = vmatprep.subr.mxu0 0.0
        %686 = vmatpush1.msra.mxu0 0.0
        %687 = vmatprep.subr.mxu0 0.0
        %688 = vmatpush1.msra.mxu0 0.0
        %689 = vmatprep.subr.mxu0 0.0
        %690 = vmatpush1.msra.mxu0 0.0
        %691 = vmatprep.subr.mxu0 0.0
        %692 = vmatpush1.msra.mxu0 0.0
        %693 = vmatprep.subr.mxu0 0.0
        %694 = vmatpush1.msra.mxu0 0.0
        %695 = vmatprep.subr.mxu0 0.0
        %696 = vmatpush1.msra.mxu0 0.0
        %697 = vmatprep.subr.mxu0 0.0
        %698 = vmatpush1.msra.mxu0 0.0
        %699 = vmatprep.subr.mxu0 0.0
        %700 = vmatpush1.msra.mxu0 0.0
        %701 = vmatprep.subr.mxu0 0.0
        %702 = vmatpush1.msra.mxu0 0.0
        %703 = vmatprep.subr.mxu0 0.0
        %704 = vmatpush1.msra.mxu0 0.0
        %705 = vmatprep.subr.mxu0 0.0
        %706 = vmatpush1.msra.mxu0 0.0
        %707 = vmatprep.subr.mxu0 0.0
        %708 = vmatpush1.msra.mxu0 0.0
        %709 = vmatprep.subr.mxu0 0.0
        %710 = vmatpush1.msra.mxu0 0.0
        %711 = vmatprep.subr.mxu0 0.0
        %712 = vmatpush1.msra.mxu0 0.0
        %713 = vmatprep.subr.mxu0 0.0
        %714 = vmatpush1.msra.mxu0 0.0
        %715 = vmatprep.subr.mxu0 0.0
        %716 = vmatpush1.msra.mxu0 0.0
        %717 = vmatprep.subr.mxu0 0.0
        %718 = vmatpush1.msra.mxu0 0.0
        %719 = vmatprep.subr.mxu0 0.0
        %720 = vmatpush1.msra.mxu0 0.0
        %721 = vmatprep.subr.mxu0 0.0
        %722 = vmatpush1.msra.mxu0 0.0
        %723 = vmatprep.mubr.f32.mxu0 0.0
        %724 = vmatmul.mubr.f32.gmra.mrb[0].mxu0 %v653
        %v725 = vpop.f32.mrb[0].mxu0
        %v726 = vadd.f32 %v648, %v725
        %v727 = vpop.f32.mrb[0].mxu0
        %v728 = vadd.f32 %v648, %v727
        %729 = vdwg.mxu0
        %730 = vxpose.xlu0.b32.start [1/16] %v558, 128
        %731 = vxpose.xlu0.b32.cont [2/16] 0.0, 128
        %732 = vxpose.xlu0.b32.cont [3/16] 0.0, 128
        %733 = vxpose.xlu0.b32.cont [4/16] 0.0, 128
        %734 = vxpose.xlu0.b32.cont [5/16] 0.0, 128
        %735 = vxpose.xlu0.b32.cont [6/16] 0.0, 128
        %736 = vxpose.xlu0.b32.cont [7/16] 0.0, 128
        %737 = vxpose.xlu0.b32.cont [8/16] 0.0, 128
        %738 = vxpose.xlu0.b32.cont [9/16] 0.0, 128
        %739 = vxpose.xlu0.b32.cont [10/16] 0.0, 128
        %740 = vxpose.xlu0.b32.cont [11/16] 0.0, 128
        %741 = vxpose.xlu0.b32.cont [12/16] 0.0, 128
        %742 = vxpose.xlu0.b32.cont [13/16] 0.0, 128
        %743 = vxpose.xlu0.b32.cont [14/16] 0.0, 128
        %744 = vxpose.xlu0.b32.cont [15/16] 0.0, 128
        %745 = vxpose.xlu0.b32.end [16/16] 0.0, 128
        %v746 = vpop.trf.xlu0
        %v747 = vpop.trf.xlu0
        %v748 = vpop.trf.xlu0
        %v749 = vpop.trf.xlu0
        %v750 = vpop.trf.xlu0
        %v751 = vpop.trf.xlu0
        %v752 = vpop.trf.xlu0
        %v753 = vpop.trf.xlu0
        %v754 = vpop.trf.xlu0
        %v755 = vpop.trf.xlu0
        %v756 = vpop.trf.xlu0
        %v757 = vpop.trf.xlu0
        %v758 = vpop.trf.xlu0
        %v759 = vpop.trf.xlu0
        %v760 = vpop.trf.xlu0
        %v761 = vpop.trf.xlu0
        %762 = vxpose.xlu0.b32.start [1/16] %v560, 128
        %763 = vxpose.xlu0.b32.cont [2/16] 0.0, 128
        %764 = vxpose.xlu0.b32.cont [3/16] 0.0, 128
        %765 = vxpose.xlu0.b32.cont [4/16] 0.0, 128
        %766 = vxpose.xlu0.b32.cont [5/16] 0.0, 128
        %767 = vxpose.xlu0.b32.cont [6/16] 0.0, 128
        %768 = vxpose.xlu0.b32.cont [7/16] 0.0, 128
        %769 = vxpose.xlu0.b32.cont [8/16] 0.0, 128
        %770 = vxpose.xlu0.b32.cont [9/16] 0.0, 128
        %771 = vxpose.xlu0.b32.cont [10/16] 0.0, 128
        %772 = vxpose.xlu0.b32.cont [11/16] 0.0, 128
        %773 = vxpose.xlu0.b32.cont [12/16] 0.0, 128
        %774 = vxpose.xlu0.b32.cont [13/16] 0.0, 128
        %775 = vxpose.xlu0.b32.cont [14/16] 0.0, 128
        %776 = vxpose.xlu0.b32.cont [15/16] 0.0, 128
        %777 = vxpose.xlu0.b32.end [16/16] 0.0, 128
        %v778 = vpop.trf.xlu0
        %v779 = vpop.trf.xlu0
        %v780 = vpop.trf.xlu0
        %v781 = vpop.trf.xlu0
        %v782 = vpop.trf.xlu0
        %v783 = vpop.trf.xlu0
        %v784 = vpop.trf.xlu0
        %v785 = vpop.trf.xlu0
        %v786 = vpop.trf.xlu0
        %v787 = vpop.trf.xlu0
        %v788 = vpop.trf.xlu0
        %v789 = vpop.trf.xlu0
        %v790 = vpop.trf.xlu0
        %v791 = vpop.trf.xlu0
        %v792 = vpop.trf.xlu0
        %v793 = vpop.trf.xlu0
        %vm794 = vcmask 15360
        %v796 = vsel %vm794, %v746, 0
        %v799 = vsel %vm794, %v747, 0
        %v802 = vsel %vm794, %v748, 0
        %v805 = vsel %vm794, %v749, 0
        %v808 = vsel %vm794, %v750, 0
        %v811 = vsel %vm794, %v751, 0
        %v814 = vsel %vm794, %v752, 0
        %v817 = vsel %vm794, %v753, 0
        %v820 = vsel %vm794, %v754, 0
        %v823 = vsel %vm794, %v755, 0
        %v826 = vsel %vm794, %v756, 0
        %v829 = vsel %vm794, %v757, 0
        %v832 = vsel %vm794, %v758, 0
        %v835 = vsel %vm794, %v759, 0
        %v838 = vsel %vm794, %v760, 0
        %v841 = vsel %vm794, %v761, 0
        %v844 = vsel %vm794, %v778, 0
        %v847 = vsel %vm794, %v779, 0
        %v850 = vsel %vm794, %v780, 0
        %v853 = vsel %vm794, %v781, 0
        %v856 = vsel %vm794, %v782, 0
        %v859 = vsel %vm794, %v783, 0
        %v862 = vsel %vm794, %v784, 0
        %v865 = vsel %vm794, %v785, 0
        %v868 = vsel %vm794, %v786, 0
        %v871 = vsel %vm794, %v787, 0
        %v874 = vsel %vm794, %v788, 0
        %v877 = vsel %vm794, %v789, 0
        %v880 = vsel %vm794, %v790, 0
        %v883 = vsel %vm794, %v791, 0
        %v886 = vsel %vm794, %v792, 0
        %v889 = vsel %vm794, %v793, 0
        %vm891 = vcmask 1041408
        %v893 = vsel %vm891, %v726, 0
        %v896 = vsel %vm891, %v728, 0
        %898 = vmatprep.subr.mxu0 %v896
        %899 = vmatpush1.msra.mxu0 %v893
        %900 = vmatprep.subr.mxu0 0.0
        %901 = vmatpush1.msra.mxu0 0.0
        %902 = vmatprep.subr.mxu0 0.0
        %903 = vmatpush1.msra.mxu0 0.0
        %904 = vmatprep.subr.mxu0 0.0
        %905 = vmatpush1.msra.mxu0 0.0
        %906 = vmatprep.subr.mxu0 0.0
        %907 = vmatpush1.msra.mxu0 0.0
        %908 = vmatprep.subr.mxu0 0.0
        %909 = vmatpush1.msra.mxu0 0.0
        %910 = vmatprep.subr.mxu0 0.0
        %911 = vmatpush1.msra.mxu0 0.0
        %912 = vmatprep.subr.mxu0 0.0
        %913 = vmatpush1.msra.mxu0 0.0
        %914 = vmatprep.subr.mxu0 0.0
        %915 = vmatpush1.msra.mxu0 0.0
        %916 = vmatprep.subr.mxu0 0.0
        %917 = vmatpush1.msra.mxu0 0.0
        %918 = vmatprep.subr.mxu0 0.0
        %919 = vmatpush1.msra.mxu0 0.0
        %920 = vmatprep.subr.mxu0 0.0
        %921 = vmatpush1.msra.mxu0 0.0
        %922 = vmatprep.subr.mxu0 0.0
        %923 = vmatpush1.msra.mxu0 0.0
        %924 = vmatprep.subr.mxu0 0.0
        %925 = vmatpush1.msra.mxu0 0.0
        %926 = vmatprep.subr.mxu0 0.0
        %927 = vmatpush1.msra.mxu0 0.0
        %928 = vmatprep.subr.mxu0 0.0
        %929 = vmatpush1.msra.mxu0 0.0
        %930 = vmatprep.subr.mxu0 0.0
        %931 = vmatpush1.msra.mxu0 0.0
        %932 = vmatprep.subr.mxu0 0.0
        %933 = vmatpush1.msra.mxu0 0.0
        %934 = vmatprep.subr.mxu0 0.0
        %935 = vmatpush1.msra.mxu0 0.0
        %936 = vmatprep.subr.mxu0 0.0
        %937 = vmatpush1.msra.mxu0 0.0
        %938 = vmatprep.subr.mxu0 0.0
        %939 = vmatpush1.msra.mxu0 0.0
        %940 = vmatprep.subr.mxu0 0.0
        %941 = vmatpush1.msra.mxu0 0.0
        %942 = vmatprep.subr.mxu0 0.0
        %943 = vmatpush1.msra.mxu0 0.0
        %944 = vmatprep.subr.mxu0 0.0
        %945 = vmatpush1.msra.mxu0 0.0
        %946 = vmatprep.subr.mxu0 0.0
        %947 = vmatpush1.msra.mxu0 0.0
        %948 = vmatprep.subr.mxu0 0.0
        %949 = vmatpush1.msra.mxu0 0.0
        %950 = vmatprep.subr.mxu0 0.0
        %951 = vmatpush1.msra.mxu0 0.0
        %952 = vmatprep.subr.mxu0 0.0
        %953 = vmatpush1.msra.mxu0 0.0
        %954 = vmatprep.subr.mxu0 0.0
        %955 = vmatpush1.msra.mxu0 0.0
        %956 = vmatprep.subr.mxu0 0.0
        %957 = vmatpush1.msra.mxu0 0.0
        %958 = vmatprep.subr.mxu0 0.0
        %959 = vmatpush1.msra.mxu0 0.0
        %960 = vmatprep.subr.mxu0 0.0
        %961 = vmatpush1.msra.mxu0 0.0
        %962 = vmatprep.mubr.f32.mxu0 0.0
        %963 = vmatmul.mubr.f32.gmra.mrb[0].mxu0 %v796
        %v964 = vpop.f32.mrb[0].mxu0
        %v965 = vadd.f32 0.0, %v964
        %v966 = vpop.f32.mrb[0].mxu0
        %v967 = vadd.f32 0.0, %v966
        %968 = vmatprep.mubr.f32.mxu0 0.0
        %969 = vmatmul.mubr.f32.gmra.mrb[0].mxu0 %v799
        %v970 = vpop.f32.mrb[0].mxu0
        %v971 = vadd.f32 0.0, %v970
        %v972 = vpop.f32.mrb[0].mxu0
        %v973 = vadd.f32 0.0, %v972
        %974 = vmatprep.mubr.f32.mxu0 0.0
        %975 = vmatmul.mubr.f32.gmra.mrb[0].mxu0 %v802
        %v976 = vpop.f32.mrb[0].mxu0
        %v977 = vadd.f32 0.0, %v976
        %v978 = vpop.f32.mrb[0].mxu0
        %v979 = vadd.f32 0.0, %v978
        %980 = vmatprep.mubr.f32.mxu0 0.0
        %981 = vmatmul.mubr.f32.gmra.mrb[0].mxu0 %v805
        %v982 = vpop.f32.mrb[0].mxu0
        %v983 = vadd.f32 0.0, %v982
        %v984 = vpop.f32.mrb[0].mxu0
        %v985 = vadd.f32 0.0, %v984
        %986 = vmatprep.mubr.f32.mxu0 0.0
        %987 = vmatmul.mubr.f32.gmra.mrb[0].mxu0 %v808
        %v988 = vpop.f32.mrb[0].mxu0
        %v989 = vadd.f32 0.0, %v988
        %v990 = vpop.f32.mrb[0].mxu0
        %v991 = vadd.f32 0.0, %v990
        %992 = vmatprep.mubr.f32.mxu0 0.0
        %993 = vmatmul.mubr.f32.gmra.mrb[0].mxu0 %v811
        %v994 = vpop.f32.mrb[0].mxu0
        %v995 = vadd.f32 0.0, %v994
        %v996 = vpop.f32.mrb[0].mxu0
        %v997 = vadd.f32 0.0, %v996
        %998 = vmatprep.mubr.f32.mxu0 0.0
        %999 = vmatmul.mubr.f32.gmra.mrb[0].mxu0 %v814
        %v1000 = vpop.f32.mrb[0].mxu0
        %v1001 = vadd.f32 0.0, %v1000
        %v1002 = vpop.f32.mrb[0].mxu0
        %v1003 = vadd.f32 0.0, %v1002
        %1004 = vmatprep.mubr.f32.mxu0 0.0
        %1005 = vmatmul.mubr.f32.gmra.mrb[0].mxu0 %v817
        %v1006 = vpop.f32.mrb[0].mxu0
        %v1007 = vadd.f32 0.0, %v1006
        %v1008 = vpop.f32.mrb[0].mxu0
        %v1009 = vadd.f32 0.0, %v1008
        %1010 = vmatprep.mubr.f32.mxu0 0.0
        %1011 = vmatmul.mubr.f32.gmra.mrb[0].mxu0 %v820
        %v1012 = vpop.f32.mrb[0].mxu0
        %v1013 = vadd.f32 0.0, %v1012
        %v1014 = vpop.f32.mrb[0].mxu0
        %v1015 = vadd.f32 0.0, %v1014
        %1016 = vmatprep.mubr.f32.mxu0 0.0
        %1017 = vmatmul.mubr.f32.gmra.mrb[0].mxu0 %v823
        %v1018 = vpop.f32.mrb[0].mxu0
        %v1019 = vadd.f32 0.0, %v1018
        %v1020 = vpop.f32.mrb[0].mxu0
        %v1021 = vadd.f32 0.0, %v1020
        %1022 = vmatprep.mubr.f32.mxu0 0.0
        %1023 = vmatmul.mubr.f32.gmra.mrb[0].mxu0 %v826
        %v1024 = vpop.f32.mrb[0].mxu0
        %v1025 = vadd.f32 0.0, %v1024
        %v1026 = vpop.f32.mrb[0].mxu0
        %v1027 = vadd.f32 0.0, %v1026
        %1028 = vmatprep.mubr.f32.mxu0 0.0
        %1029 = vmatmul.mubr.f32.gmra.mrb[0].mxu0 %v829
        %v1030 = vpop.f32.mrb[0].mxu0
        %v1031 = vadd.f32 0.0, %v1030
        %v1032 = vpop.f32.mrb[0].mxu0
        %v1033 = vadd.f32 0.0, %v1032
        %1034 = vmatprep.mubr.f32.mxu0 0.0
        %1035 = vmatmul.mubr.f32.gmra.mrb[0].mxu0 %v832
        %v1036 = vpop.f32.mrb[0].mxu0
        %v1037 = vadd.f32 0.0, %v1036
        %v1038 = vpop.f32.mrb[0].mxu0
        %v1039 = vadd.f32 0.0, %v1038
        %1040 = vmatprep.mubr.f32.mxu0 0.0
        %1041 = vmatmul.mubr.f32.gmra.mrb[0].mxu0 %v835
        %v1042 = vpop.f32.mrb[0].mxu0
        %v1043 = vadd.f32 0.0, %v1042
        %v1044 = vpop.f32.mrb[0].mxu0
        %v1045 = vadd.f32 0.0, %v1044
        %1046 = vmatprep.mubr.f32.mxu0 0.0
        %1047 = vmatmul.mubr.f32.gmra.mrb[0].mxu0 %v838
        %v1048 = vpop.f32.mrb[0].mxu0
        %v1049 = vadd.f32 0.0, %v1048
        %v1050 = vpop.f32.mrb[0].mxu0
        %v1051 = vadd.f32 0.0, %v1050
        %1052 = vmatprep.mubr.f32.mxu0 0.0
        %1053 = vmatmul.mubr.f32.gmra.mrb[0].mxu0 %v841
        %v1054 = vpop.f32.mrb[0].mxu0
        %v1055 = vadd.f32 0.0, %v1054
        %v1056 = vpop.f32.mrb[0].mxu0
        %v1057 = vadd.f32 0.0, %v1056
        %1058 = vmatprep.mubr.f32.mxu0 0.0
        %1059 = vmatmul.mubr.f32.gmra.mrb[0].mxu0 %v844
        %v1060 = vpop.f32.mrb[0].mxu0
        %v1061 = vadd.f32 0.0, %v1060
        %v1062 = vpop.f32.mrb[0].mxu0
        %v1063 = vadd.f32 0.0, %v1062
        %1064 = vmatprep.mubr.f32.mxu0 0.0
        %1065 = vmatmul.mubr.f32.gmra.mrb[0].mxu0 %v847
        %v1066 = vpop.f32.mrb[0].mxu0
        %v1067 = vadd.f32 0.0, %v1066
        %v1068 = vpop.f32.mrb[0].mxu0
        %v1069 = vadd.f32 0.0, %v1068
        %1070 = vmatprep.mubr.f32.mxu0 0.0
        %1071 = vmatmul.mubr.f32.gmra.mrb[0].mxu0 %v850
        %v1072 = vpop.f32.mrb[0].mxu0
        %v1073 = vadd.f32 0.0, %v1072
        %v1074 = vpop.f32.mrb[0].mxu0
        %v1075 = vadd.f32 0.0, %v1074
        %1076 = vmatprep.mubr.f32.mxu0 0.0
        %1077 = vmatmul.mubr.f32.gmra.mrb[0].mxu0 %v853
        %v1078 = vpop.f32.mrb[0].mxu0
        %v1079 = vadd.f32 0.0, %v1078
        %v1080 = vpop.f32.mrb[0].mxu0
        %v1081 = vadd.f32 0.0, %v1080
        %1082 = vmatprep.mubr.f32.mxu0 0.0
        %1083 = vmatmul.mubr.f32.gmra.mrb[0].mxu0 %v856
        %v1084 = vpop.f32.mrb[0].mxu0
        %v1085 = vadd.f32 0.0, %v1084
        %v1086 = vpop.f32.mrb[0].mxu0
        %v1087 = vadd.f32 0.0, %v1086
        %1088 = vmatprep.mubr.f32.mxu0 0.0
        %1089 = vmatmul.mubr.f32.gmra.mrb[0].mxu0 %v859
        %v1090 = vpop.f32.mrb[0].mxu0
        %v1091 = vadd.f32 0.0, %v1090
        %v1092 = vpop.f32.mrb[0].mxu0
        %v1093 = vadd.f32 0.0, %v1092
        %1094 = vmatprep.mubr.f32.mxu0 0.0
        %1095 = vmatmul.mubr.f32.gmra.mrb[0].mxu0 %v862
        %v1096 = vpop.f32.mrb[0].mxu0
        %v1097 = vadd.f32 0.0, %v1096
        %v1098 = vpop.f32.mrb[0].mxu0
        %v1099 = vadd.f32 0.0, %v1098
        %1100 = vmatprep.mubr.f32.mxu0 0.0
        %1101 = vmatmul.mubr.f32.gmra.mrb[0].mxu0 %v865
        %v1102 = vpop.f32.mrb[0].mxu0
        %v1103 = vadd.f32 0.0, %v1102
        %v1104 = vpop.f32.mrb[0].mxu0
        %v1105 = vadd.f32 0.0, %v1104
        %1106 = vmatprep.mubr.f32.mxu0 0.0
        %1107 = vmatmul.mubr.f32.gmra.mrb[0].mxu0 %v868
        %v1108 = vpop.f32.mrb[0].mxu0
        %v1109 = vadd.f32 0.0, %v1108
        %v1110 = vpop.f32.mrb[0].mxu0
        %v1111 = vadd.f32 0.0, %v1110
        %1112 = vmatprep.mubr.f32.mxu0 0.0
        %1113 = vmatmul.mubr.f32.gmra.mrb[0].mxu0 %v871
        %v1114 = vpop.f32.mrb[0].mxu0
        %v1115 = vadd.f32 0.0, %v1114
        %v1116 = vpop.f32.mrb[0].mxu0
        %v1117 = vadd.f32 0.0, %v1116
        %1118 = vmatprep.mubr.f32.mxu0 0.0
        %1119 = vmatmul.mubr.f32.gmra.mrb[0].mxu0 %v874
        %v1120 = vpop.f32.mrb[0].mxu0
        %v1121 = vadd.f32 0.0, %v1120
        %v1122 = vpop.f32.mrb[0].mxu0
        %v1123 = vadd.f32 0.0, %v1122
        %1124 = vmatprep.mubr.f32.mxu0 0.0
        %1125 = vmatmul.mubr.f32.gmra.mrb[0].mxu0 %v877
        %v1126 = vpop.f32.mrb[0].mxu0
        %v1127 = vadd.f32 0.0, %v1126
        %v1128 = vpop.f32.mrb[0].mxu0
        %v1129 = vadd.f32 0.0, %v1128
        %1130 = vmatprep.mubr.f32.mxu0 0.0
        %1131 = vmatmul.mubr.f32.gmra.mrb[0].mxu0 %v880
        %v1132 = vpop.f32.mrb[0].mxu0
        %v1133 = vadd.f32 0.0, %v1132
        %v1134 = vpop.f32.mrb[0].mxu0
        %v1135 = vadd.f32 0.0, %v1134
        %1136 = vmatprep.mubr.f32.mxu0 0.0
        %1137 = vmatmul.mubr.f32.gmra.mrb[0].mxu0 %v883
        %v1138 = vpop.f32.mrb[0].mxu0
        %v1139 = vadd.f32 0.0, %v1138
        %v1140 = vpop.f32.mrb[0].mxu0
        %v1141 = vadd.f32 0.0, %v1140
        %1142 = vmatprep.mubr.f32.mxu0 0.0
        %1143 = vmatmul.mubr.f32.gmra.mrb[0].mxu0 %v886
        %v1144 = vpop.f32.mrb[0].mxu0
        %v1145 = vadd.f32 0.0, %v1144
        %v1146 = vpop.f32.mrb[0].mxu0
        %v1147 = vadd.f32 0.0, %v1146
        %1148 = vmatprep.mubr.f32.mxu0 0.0
        %1149 = vmatmul.mubr.f32.gmra.mrb[0].mxu0 %v889
        %v1150 = vpop.f32.mrb[0].mxu0
        %v1151 = vadd.f32 0.0, %v1150
        %v1152 = vpop.f32.mrb[0].mxu0
        %v1153 = vadd.f32 0.0, %v1152
        %1154 = vdwg.mxu0
        %v1155 = vmax.f32 %v965, %v977
        %v1156 = vmax.f32 %v971, %v983
        %v1157 = vmax.f32 %v1155, %v989
        %v1158 = vmax.f32 %v1156, %v995
        %v1159 = vmax.f32 %v1157, %v1001
        %v1160 = vmax.f32 %v1158, %v1007
        %v1161 = vmax.f32 %v1159, %v1013
        %v1162 = vmax.f32 %v1160, %v1019
        %v1163 = vmax.f32 %v1161, %v1025
        %v1164 = vmax.f32 %v1162, %v1031
        %v1165 = vmax.f32 %v1163, %v1037
        %v1166 = vmax.f32 %v1164, %v1043
        %v1167 = vmax.f32 %v1165, %v1049
        %v1168 = vmax.f32 %v1166, %v1055
        %v1169 = vmax.f32 %v1167, %v1061
        %v1170 = vmax.f32 %v1168, %v1067
        %v1171 = vmax.f32 %v1169, %v1073
        %v1172 = vmax.f32 %v1170, %v1079
        %v1173 = vmax.f32 %v1171, %v1085
        %v1174 = vmax.f32 %v1172, %v1091
        %v1175 = vmax.f32 %v1173, %v1097
        %v1176 = vmax.f32 %v1174, %v1103
        %v1177 = vmax.f32 %v1175, %v1109
        %v1178 = vmax.f32 %v1176, %v1115
        %v1179 = vmax.f32 %v1177, %v1121
        %v1180 = vmax.f32 %v1178, %v1127
        %v1181 = vmax.f32 %v1179, %v1133
        %v1182 = vmax.f32 %v1180, %v1139
        %v1183 = vmax.f32 %v1181, %v1145
        %v1184 = vmax.f32 %v1182, %v1151
        %v1185 = vmax.f32 %v1183, %v1184
        %v1186 = vrot.slane %v1185, 4
        %v1187 = vmax.f32 %v1185, %v1186
        %v1188 = vrot.slane %v1187, 2
        %v1189 = vmax.f32 %v1187, %v1188
        %v1190 = vrot.slane %v1189, 1
        %v1191 = vmax.f32 %v1189, %v1190
        %v1192 = vmax.f32 %v967, %v979
        %v1193 = vmax.f32 %v973, %v985
        %v1194 = vmax.f32 %v1192, %v991
        %v1195 = vmax.f32 %v1193, %v997
        %v1196 = vmax.f32 %v1194, %v1003
        %v1197 = vmax.f32 %v1195, %v1009
        %v1198 = vmax.f32 %v1196, %v1015
        %v1199 = vmax.f32 %v1197, %v1021
        %v1200 = vmax.f32 %v1198, %v1027
        %v1201 = vmax.f32 %v1199, %v1033
        %v1202 = vmax.f32 %v1200, %v1039
        %v1203 = vmax.f32 %v1201, %v1045
        %v1204 = vmax.f32 %v1202, %v1051
        %v1205 = vmax.f32 %v1203, %v1057
        %v1206 = vmax.f32 %v1204, %v1063
        %v1207 = vmax.f32 %v1205, %v1069
        %v1208 = vmax.f32 %v1206, %v1075
        %v1209 = vmax.f32 %v1207, %v1081
        %v1210 = vmax.f32 %v1208, %v1087
        %v1211 = vmax.f32 %v1209, %v1093
        %v1212 = vmax.f32 %v1210, %v1099
        %v1213 = vmax.f32 %v1211, %v1105
        %v1214 = vmax.f32 %v1212, %v1111
        %v1215 = vmax.f32 %v1213, %v1117
        %v1216 = vmax.f32 %v1214, %v1123
        %v1217 = vmax.f32 %v1215, %v1129
        %v1218 = vmax.f32 %v1216, %v1135
        %v1219 = vmax.f32 %v1217, %v1141
        %v1220 = vmax.f32 %v1218, %v1147
        %v1221 = vmax.f32 %v1219, %v1153
        %v1222 = vmax.f32 %v1220, %v1221
        %v1223 = vrot.slane %v1222, 4
        %v1224 = vmax.f32 %v1222, %v1223
        %v1225 = vrot.slane %v1224, 2
        %v1226 = vmax.f32 %v1224, %v1225
        %v1227 = vrot.slane %v1226, 1
        %v1228 = vmax.f32 %v1226, %v1227
        %v1229 = vsub.f32 %v965, %v1191
        %v1230 = vsub.f32 %v967, %v1228
        %v1231 = vsub.f32 %v971, %v1191
        %v1232 = vsub.f32 %v973, %v1228
        %v1233 = vsub.f32 %v977, %v1191
        %v1234 = vsub.f32 %v979, %v1228
        %v1235 = vsub.f32 %v983, %v1191
        %v1236 = vsub.f32 %v985, %v1228
        %v1237 = vsub.f32 %v989, %v1191
        %v1238 = vsub.f32 %v991, %v1228
        %v1239 = vsub.f32 %v995, %v1191
        %v1240 = vsub.f32 %v997, %v1228
        %v1241 = vsub.f32 %v1001, %v1191
        %v1242 = vsub.f32 %v1003, %v1228
        %v1243 = vsub.f32 %v1007, %v1191
        %v1244 = vsub.f32 %v1009, %v1228
        %v1245 = vsub.f32 %v1013, %v1191
        %v1246 = vsub.f32 %v1015, %v1228
        %v1247 = vsub.f32 %v1019, %v1191
        %v1248 = vsub.f32 %v1021, %v1228
        %v1249 = vsub.f32 %v1025, %v1191
        %v1250 = vsub.f32 %v1027, %v1228
        %v1251 = vsub.f32 %v1031, %v1191
        %v1252 = vsub.f32 %v1033, %v1228
        %v1253 = vsub.f32 %v1037, %v1191
        %v1254 = vsub.f32 %v1039, %v1228
        %v1255 = vsub.f32 %v1043, %v1191
        %v1256 = vsub.f32 %v1045, %v1228
        %v1257 = vsub.f32 %v1049, %v1191
        %v1258 = vsub.f32 %v1051, %v1228
        %v1259 = vsub.f32 %v1055, %v1191
        %v1260 = vsub.f32 %v1057, %v1228
        %v1261 = vsub.f32 %v1061, %v1191
        %v1262 = vsub.f32 %v1063, %v1228
        %v1263 = vsub.f32 %v1067, %v1191
        %v1264 = vsub.f32 %v1069, %v1228
        %v1265 = vsub.f32 %v1073, %v1191
        %v1266 = vsub.f32 %v1075, %v1228
        %v1267 = vsub.f32 %v1079, %v1191
        %v1268 = vsub.f32 %v1081, %v1228
        %v1269 = vsub.f32 %v1085, %v1191
        %v1270 = vsub.f32 %v1087, %v1228
        %v1271 = vsub.f32 %v1091, %v1191
        %v1272 = vsub.f32 %v1093, %v1228
        %v1273 = vsub.f32 %v1097, %v1191
        %v1274 = vsub.f32 %v1099, %v1228
        %v1275 = vsub.f32 %v1103, %v1191
        %v1276 = vsub.f32 %v1105, %v1228
        %v1277 = vsub.f32 %v1109, %v1191
        %v1278 = vsub.f32 %v1111, %v1228
        %v1279 = vsub.f32 %v1115, %v1191
        %v1280 = vsub.f32 %v1117, %v1228
        %v1281 = vsub.f32 %v1121, %v1191
        %v1282 = vsub.f32 %v1123, %v1228
        %v1283 = vsub.f32 %v1127, %v1191
        %v1284 = vsub.f32 %v1129, %v1228
        %v1285 = vsub.f32 %v1133, %v1191
        %v1286 = vsub.f32 %v1135, %v1228
        %v1287 = vsub.f32 %v1139, %v1191
        %v1288 = vsub.f32 %v1141, %v1228
        %v1289 = vsub.f32 %v1145, %v1191
        %v1290 = vsub.f32 %v1147, %v1228
        %v1291 = vsub.f32 %v1151, %v1191
        %v1292 = vsub.f32 %v1153, %v1228
        %v1293 = vmul.f32 %v1229, 1.442695
        %v1294 = vpow.pop %v1293
        %v1295 = vmul.f32 %v1230, 1.442695
        %v1296 = vpow.pop %v1295
        %v1297 = vmul.f32 %v1231, 1.442695
        %v1298 = vpow.pop %v1297
        %v1299 = vmul.f32 %v1232, 1.442695
        %v1300 = vpow.pop %v1299
        %v1301 = vmul.f32 %v1233, 1.442695
        %v1302 = vpow.pop %v1301
        %v1303 = vmul.f32 %v1234, 1.442695
        %v1304 = vpow.pop %v1303
        %v1305 = vmul.f32 %v1235, 1.442695
        %v1306 = vpow.pop %v1305
        %v1307 = vmul.f32 %v1236, 1.442695
        %v1308 = vpow.pop %v1307
        %v1309 = vmul.f32 %v1237, 1.442695
        %v1310 = vpow.pop %v1309
        %v1311 = vmul.f32 %v1238, 1.442695
        %v1312 = vpow.pop %v1311
        %v1313 = vmul.f32 %v1239, 1.442695
        %v1314 = vpow.pop %v1313
        %v1315 = vmul.f32 %v1240, 1.442695
        %v1316 = vpow.pop %v1315
        %v1317 = vmul.f32 %v1241, 1.442695
        %v1318 = vpow.pop %v1317
        %v1319 = vmul.f32 %v1242, 1.442695
        %v1320 = vpow.pop %v1319
        %v1321 = vmul.f32 %v1243, 1.442695
        %v1322 = vpow.pop %v1321
        %v1323 = vmul.f32 %v1244, 1.442695
        %v1324 = vpow.pop %v1323
        %v1325 = vmul.f32 %v1245, 1.442695
        %v1326 = vpow.pop %v1325
        %v1327 = vmul.f32 %v1246, 1.442695
        %v1328 = vpow.pop %v1327
        %v1329 = vmul.f32 %v1247, 1.442695
        %v1330 = vpow.pop %v1329
        %v1331 = vmul.f32 %v1248, 1.442695
        %v1332 = vpow.pop %v1331
        %v1333 = vmul.f32 %v1249, 1.442695
        %v1334 = vpow.pop %v1333
        %v1335 = vmul.f32 %v1250, 1.442695
        %v1336 = vpow.pop %v1335
        %v1337 = vmul.f32 %v1251, 1.442695
        %v1338 = vpow.pop %v1337
        %v1339 = vmul.f32 %v1252, 1.442695
        %v1340 = vpow.pop %v1339
        %v1341 = vmul.f32 %v1253, 1.442695
        %v1342 = vpow.pop %v1341
        %v1343 = vmul.f32 %v1254, 1.442695
        %v1344 = vpow.pop %v1343
        %v1345 = vmul.f32 %v1255, 1.442695
        %v1346 = vpow.pop %v1345
        %v1347 = vmul.f32 %v1256, 1.442695
        %v1348 = vpow.pop %v1347
        %v1349 = vmul.f32 %v1257, 1.442695
        %v1350 = vpow.pop %v1349
        %v1351 = vmul.f32 %v1258, 1.442695
        %v1352 = vpow.pop %v1351
        %v1353 = vmul.f32 %v1259, 1.442695
        %v1354 = vpow.pop %v1353
        %v1355 = vmul.f32 %v1260, 1.442695
        %v1356 = vpow.pop %v1355
        %v1357 = vmul.f32 %v1261, 1.442695
        %v1358 = vpow.pop %v1357
        %v1359 = vmul.f32 %v1262, 1.442695
        %v1360 = vpow.pop %v1359
        %v1361 = vmul.f32 %v1263, 1.442695
        %v1362 = vpow.pop %v1361
        %v1363 = vmul.f32 %v1264, 1.442695
        %v1364 = vpow.pop %v1363
        %v1365 = vmul.f32 %v1265, 1.442695
        %v1366 = vpow.pop %v1365
        %v1367 = vmul.f32 %v1266, 1.442695
        %v1368 = vpow.pop %v1367
        %v1369 = vmul.f32 %v1267, 1.442695
        %v1370 = vpow.pop %v1369
        %v1371 = vmul.f32 %v1268, 1.442695
        %v1372 = vpow.pop %v1371
        %v1373 = vmul.f32 %v1269, 1.442695
        %v1374 = vpow.pop %v1373
        %v1375 = vmul.f32 %v1270, 1.442695
        %v1376 = vpow.pop %v1375
        %v1377 = vmul.f32 %v1271, 1.442695
        %v1378 = vpow.pop %v1377
        %v1379 = vmul.f32 %v1272, 1.442695
        %v1380 = vpow.pop %v1379
        %v1381 = vmul.f32 %v1273, 1.442695
        %v1382 = vpow.pop %v1381
        %v1383 = vmul.f32 %v1274, 1.442695
        %v1384 = vpow.pop %v1383
        %v1385 = vmul.f32 %v1275, 1.442695
        %v1386 = vpow.pop %v1385
        %v1387 = vmul.f32 %v1276, 1.442695
        %v1388 = vpow.pop %v1387
        %v1389 = vmul.f32 %v1277, 1.442695
        %v1390 = vpow.pop %v1389
        %v1391 = vmul.f32 %v1278, 1.442695
        %v1392 = vpow.pop %v1391
        %v1393 = vmul.f32 %v1279, 1.442695
        %v1394 = vpow.pop %v1393
        %v1395 = vmul.f32 %v1280, 1.442695
        %v1396 = vpow.pop %v1395
        %v1397 = vmul.f32 %v1281, 1.442695
        %v1398 = vpow.pop %v1397
        %v1399 = vmul.f32 %v1282, 1.442695
        %v1400 = vpow.pop %v1399
        %v1401 = vmul.f32 %v1283, 1.442695
        %v1402 = vpow.pop %v1401
        %v1403 = vmul.f32 %v1284, 1.442695
        %v1404 = vpow.pop %v1403
        %v1405 = vmul.f32 %v1285, 1.442695
        %v1406 = vpow.pop %v1405
        %v1407 = vmul.f32 %v1286, 1.442695
        %v1408 = vpow.pop %v1407
        %v1409 = vmul.f32 %v1287, 1.442695
        %v1410 = vpow.pop %v1409
        %v1411 = vmul.f32 %v1288, 1.442695
        %v1412 = vpow.pop %v1411
        %v1413 = vmul.f32 %v1289, 1.442695
        %v1414 = vpow.pop %v1413
        %v1415 = vmul.f32 %v1290, 1.442695
        %v1416 = vpow.pop %v1415
        %v1417 = vmul.f32 %v1291, 1.442695
        %v1418 = vpow.pop %v1417
        %v1419 = vmul.f32 %v1292, 1.442695
        %v1420 = vpow.pop %v1419
        %v1421 = vadd.f32 %v1294, %v1298
        %v1422 = vadd.f32 %v1421, %v1302
        %v1423 = vadd.f32 %v1422, %v1306
        %v1424 = vadd.f32 %v1423, %v1310
        %v1425 = vadd.f32 %v1424, %v1314
        %v1426 = vadd.f32 %v1425, %v1318
        %v1427 = vadd.f32 %v1426, %v1322
        %v1428 = vadd.f32 %v1427, %v1326
        %v1429 = vadd.f32 %v1428, %v1330
        %v1430 = vadd.f32 %v1429, %v1334
        %v1431 = vadd.f32 %v1430, %v1338
        %v1432 = vadd.f32 %v1431, %v1342
        %v1433 = vadd.f32 %v1432, %v1346
        %v1434 = vadd.f32 %v1433, %v1350
        %v1435 = vadd.f32 %v1434, %v1354
        %v1436 = vadd.f32 %v1435, %v1358
        %v1437 = vadd.f32 %v1436, %v1362
        %v1438 = vadd.f32 %v1437, %v1366
        %v1439 = vadd.f32 %v1438, %v1370
        %v1440 = vadd.f32 %v1439, %v1374
        %v1441 = vadd.f32 %v1440, %v1378
        %v1442 = vadd.f32 %v1441, %v1382
        %v1443 = vadd.f32 %v1442, %v1386
        %v1444 = vadd.f32 %v1443, %v1390
        %v1445 = vadd.f32 %v1444, %v1394
        %v1446 = vadd.f32 %v1445, %v1398
        %v1447 = vadd.f32 %v1446, %v1402
        %v1448 = vadd.f32 %v1447, %v1406
        %v1449 = vadd.f32 %v1448, %v1410
        %v1450 = vadd.f32 %v1449, %v1414
        %v1451 = vadd.f32 %v1450, %v1418
        %v1452 = vrot.slane %v1451, 4
        %v1453 = vadd.f32 %v1451, %v1452
        %v1454 = vrot.slane %v1453, 2
        %v1455 = vadd.f32 %v1453, %v1454
        %v1456 = vrot.slane %v1455, 1
        %v1457 = vadd.f32 %v1455, %v1456
        %v1458 = vadd.f32 %v1296, %v1300
        %v1459 = vadd.f32 %v1458, %v1304
        %v1460 = vadd.f32 %v1459, %v1308
        %v1461 = vadd.f32 %v1460, %v1312
        %v1462 = vadd.f32 %v1461, %v1316
        %v1463 = vadd.f32 %v1462, %v1320
        %v1464 = vadd.f32 %v1463, %v1324
        %v1465 = vadd.f32 %v1464, %v1328
        %v1466 = vadd.f32 %v1465, %v1332
        %v1467 = vadd.f32 %v1466, %v1336
        %v1468 = vadd.f32 %v1467, %v1340
        %v1469 = vadd.f32 %v1468, %v1344
        %v1470 = vadd.f32 %v1469, %v1348
        %v1471 = vadd.f32 %v1470, %v1352
        %v1472 = vadd.f32 %v1471, %v1356
        %v1473 = vadd.f32 %v1472, %v1360
        %v1474 = vadd.f32 %v1473, %v1364
        %v1475 = vadd.f32 %v1474, %v1368
        %v1476 = vadd.f32 %v1475, %v1372
        %v1477 = vadd.f32 %v1476, %v1376
        %v1478 = vadd.f32 %v1477, %v1380
        %v1479 = vadd.f32 %v1478, %v1384
        %v1480 = vadd.f32 %v1479, %v1388
        %v1481 = vadd.f32 %v1480, %v1392
        %v1482 = vadd.f32 %v1481, %v1396
        %v1483 = vadd.f32 %v1482, %v1400
        %v1484 = vadd.f32 %v1483, %v1404
        %v1485 = vadd.f32 %v1484, %v1408
        %v1486 = vadd.f32 %v1485, %v1412
        %v1487 = vadd.f32 %v1486, %v1416
        %v1488 = vadd.f32 %v1487, %v1420
        %v1489 = vrot.slane %v1488, 4
        %v1490 = vadd.f32 %v1488, %v1489
        %v1491 = vrot.slane %v1490, 2
        %v1492 = vadd.f32 %v1490, %v1491
        %v1493 = vrot.slane %v1492, 1
        %v1494 = vadd.f32 %v1492, %v1493
        %1495 = vmatprep.subr.mxu0 %v1296
        %1496 = vmatpush1.msra.mxu0 %v1294
        %1497 = vmatprep.subr.mxu0 %v1300
        %1498 = vmatpush1.msra.mxu0 %v1298
        %1499 = vmatprep.subr.mxu0 %v1304
        %1500 = vmatpush1.msra.mxu0 %v1302
        %1501 = vmatprep.subr.mxu0 %v1308
        %1502 = vmatpush1.msra.mxu0 %v1306
        %1503 = vmatprep.subr.mxu0 %v1312
        %1504 = vmatpush1.msra.mxu0 %v1310
        %1505 = vmatprep.subr.mxu0 %v1316
        %1506 = vmatpush1.msra.mxu0 %v1314
        %1507 = vmatprep.subr.mxu0 %v1320
        %1508 = vmatpush1.msra.mxu0 %v1318
        %1509 = vmatprep.subr.mxu0 %v1324
        %1510 = vmatpush1.msra.mxu0 %v1322
        %1511 = vmatprep.subr.mxu0 %v1328
        %1512 = vmatpush1.msra.mxu0 %v1326
        %1513 = vmatprep.subr.mxu0 %v1332
        %1514 = vmatpush1.msra.mxu0 %v1330
        %1515 = vmatprep.subr.mxu0 %v1336
        %1516 = vmatpush1.msra.mxu0 %v1334
        %1517 = vmatprep.subr.mxu0 %v1340
        %1518 = vmatpush1.msra.mxu0 %v1338
        %1519 = vmatprep.subr.mxu0 %v1344
        %1520 = vmatpush1.msra.mxu0 %v1342
        %1521 = vmatprep.subr.mxu0 %v1348
        %1522 = vmatpush1.msra.mxu0 %v1346
        %1523 = vmatprep.subr.mxu0 %v1352
        %1524 = vmatpush1.msra.mxu0 %v1350
        %1525 = vmatprep.subr.mxu0 %v1356
        %1526 = vmatpush1.msra.mxu0 %v1354
        %1527 = vmatprep.subr.mxu0 %v1360
        %1528 = vmatpush1.msra.mxu0 %v1358
        %1529 = vmatprep.subr.mxu0 %v1364
        %1530 = vmatpush1.msra.mxu0 %v1362
        %1531 = vmatprep.subr.mxu0 %v1368
        %1532 = vmatpush1.msra.mxu0 %v1366
        %1533 = vmatprep.subr.mxu0 %v1372
        %1534 = vmatpush1.msra.mxu0 %v1370
        %1535 = vmatprep.subr.mxu0 %v1376
        %1536 = vmatpush1.msra.mxu0 %v1374
        %1537 = vmatprep.subr.mxu0 %v1380
        %1538 = vmatpush1.msra.mxu0 %v1378
        %1539 = vmatprep.subr.mxu0 %v1384
        %1540 = vmatpush1.msra.mxu0 %v1382
        %1541 = vmatprep.subr.mxu0 %v1388
        %1542 = vmatpush1.msra.mxu0 %v1386
        %1543 = vmatprep.subr.mxu0 %v1392
        %1544 = vmatpush1.msra.mxu0 %v1390
        %1545 = vmatprep.subr.mxu0 %v1396
        %1546 = vmatpush1.msra.mxu0 %v1394
        %1547 = vmatprep.subr.mxu0 %v1400
        %1548 = vmatpush1.msra.mxu0 %v1398
        %1549 = vmatprep.subr.mxu0 %v1404
        %1550 = vmatpush1.msra.mxu0 %v1402
        %1551 = vmatprep.subr.mxu0 %v1408
        %1552 = vmatpush1.msra.mxu0 %v1406
        %1553 = vmatprep.subr.mxu0 %v1412
        %1554 = vmatpush1.msra.mxu0 %v1410
        %1555 = vmatprep.subr.mxu0 %v1416
        %1556 = vmatpush1.msra.mxu0 %v1414
        %1557 = vmatprep.subr.mxu0 %v1420
        %1558 = vmatpush1.msra.mxu0 %v1418
        %1559 = vmatprep.mubr.f32.mxu0 %v641
        %1560 = vmatmul.mubr.f32.gmra.mrb[0].mxu0 %v639
        %v1561 = vpop.f32.mrb[0].mxu0
        %v1562 = vadd.f32 0.0, %v1561
        %v1563 = vpop.f32.mrb[0].mxu0
        %v1564 = vadd.f32 0.0, %v1563
        %1565 = vdwg.mxu0
        %v1566 = vrcp.pop %v1457
        %v1567 = vrcp.pop %v1494
        %v1568 = vmul.f32 %v1562, %v1566
        %v1569 = vmul.f32 %v1564, %v1567
        %v1570 = vld [vmem:[%s5] sm:$0xf]
        %1572 = vset.pattern.permute.xlu0 0
        %1573 = vperm.xlu0 %1572, %v1570
        %v1574 = vpop.permute.xlu0 %1573
        %v1576 = vmul.f32 %v1568, %v1574
        %v1577 = vmul.f32 %v1569, %v1574
        %v1578 = vsel %vm486, %v1576, 0.0
        %v1579 = vrot.slane %v1578, 4
        %v1580 = vadd.f32 %v1578, %v1579
        %v1581 = vrot.slane %v1580, 2
        %v1582 = vadd.f32 %v1580, %v1581
        %v1583 = vrot.slane %v1582, 1
        %v1584 = vadd.f32 %v1582, %v1583
        %v1585 = vsel %vm486, %v1577, 0.0
        %v1586 = vrot.slane %v1585, 4
        %v1587 = vadd.f32 %v1585, %v1586
        %v1588 = vrot.slane %v1587, 2
        %v1589 = vadd.f32 %v1587, %v1588
        %v1590 = vrot.slane %v1589, 1
        %v1591 = vadd.f32 %v1589, %v1590
        %s1592 = sld [smem:[#allocation6]]
        %v1593 = vstv %s1592
        %v1594 = vadd.f32 %v1584, %v1593
        %v1595 = vadd.f32 %v1591, %v1593
        %v1596 = vxor.u32 %v1594, 2147483648
        %v1597 = vxor.u32 %v1595, 2147483648
        %v1598 = vmul.f32 %v1596, 1.442695
        %v1599 = vpow.pop %v1598
        %v1600 = vmul.f32 %v1597, 1.442695
        %v1601 = vpow.pop %v1600
        %v1602 = vadd.f32 %v1599, 1.0
        %v1603 = vadd.f32 %v1601, 1.0
        %v1604 = vrcp.pop %v1602
        %v1605 = vmul.f32 1.0, %v1604
        %v1606 = vrcp.pop %v1603
        %v1607 = vmul.f32 1.0, %v1606
        %v1608 = vsub.f32 1.0, %v1605
        %v1609 = vsub.f32 1.0, %v1607
        %v1610 = vmul.f32 %v1568, %v1608
        %v1611 = vmul.f32 %v1569, %v1609
        %s1612 = sld [smem:[#allocation6 + $0x1]]
        %v1613 = vstv %s1612
        %v1614 = vmul.f32 %v1613, %v1568
        %v1615 = vmul.f32 %v1613, %v1569
        %v1617 = vadd.f32 %v1614, %v472
        %v1618 = vadd.f32 %v1615, %v651
        %v1621 = vcombine.low %v1617, %v1618
        %1623 = vst [vmem:[%s455] sm:$0xff] %v1621
        %v1626 = vcombine.low %v1610, %v1611
        %1628 = vst [vmem:[%s462] sm:$0xff] %v1626
        %s1629 = sand.u32 %s277, 1
        %s1630 = scalar_lea.sflag [#allocation4], %s1629
        %s1631 = sand.u32 %s277, 1
        %s1632 = smul.addr %s1631, 8
        %s1633 = scalar_lea.vmem [#allocation7], %s1632
        %s1634 = sand.u32 %s305, 1
        %s1635 = scalar_lea.sflag [#allocation9], %s1634
        %s1636 = sand.u32 %s305, 1
        %s1637 = smul.addr %s1636, 8
        %s1638 = scalar_lea.vmem [#allocation8], %s1637
        // Predicated region
        $region69: #{tpu_custom_call.1} parent=59 // pred_check
          %p1639 = pneg %p287
        $region70: #{tpu_custom_call.1} parent=59 // pred_check_branch
          %1641 = sbr.rel (%p1639) target = $region72
        $region71: #{tpu_custom_call.1} parent=59 // pred_region
          %s1642 = smul.u32 2, %s38
          %s1644 = ssub.s32 128, 128
          %1645 = vsyncadd %s1630, %s1644
          %s1646 = smul.addr %s37, 2
          %s1647 = sadd.s32 %s1642, %s1646
          %s1648 = smul.addr %s1647, 64
          %s1649 = scalar_lea.hbm %s10, %s1648
          %s1651 = sshll.u32 %s1633, 4
          %s1652 = int_to_ptr.vmem [resolvable:$true] %s1651
          %1654 = dma.vmem_to_hbm [thread:$0]  %s1652, 128, %s1649, %s1630
        $region72: #{tpu_custom_call.1} parent=59 // pred_fallthru
          _
        // Predicated region
        $region73: #{tpu_custom_call.1} parent=59 // pred_check
          %p1655 = pneg %p315
        $region74: #{tpu_custom_call.1} parent=59 // pred_check_branch
          %1657 = sbr.rel (%p1655) target = $region76
        $region75: #{tpu_custom_call.1} parent=59 // pred_region
          %s1658 = smul.u32 2, %s38
          %s1660 = ssub.s32 128, 128
          %1661 = vsyncadd %s1635, %s1660
          %s1662 = smul.addr %s37, 2
          %s1663 = sadd.s32 %s1658, %s1662
          %s1664 = smul.addr %s1663, 64
          %s1665 = scalar_lea.hbm %s11, %s1664
          %s1667 = sshll.u32 %s1638, 4
          %s1668 = int_to_ptr.vmem [resolvable:$true] %s1667
          %1670 = dma.vmem_to_hbm [thread:$0]  %s1668, 128, %s1665, %s1635
        $region76: #{tpu_custom_call.1} parent=59 // pred_fallthru
          _
      $region60: #{tpu_custom_call.1} parent=5 // pred_fallthru
        _
      %p1671 = scmp.le.s32.totalorder 2, %s28
      // Predicated region
      $region77: #{tpu_custom_call.1} parent=5 // pred_check
        %p1672 = pneg %p1671
      $region78: #{tpu_custom_call.1} parent=5 // pred_check_branch
        %1674 = sbr.rel (%p1672) target = $region80
      $region79: #{tpu_custom_call.1} parent=5 // pred_region
        %s1675 = ssub.s32 %s28, 2
        // Predicated region
        $region81: #{tpu_custom_call.1} parent=79 // pred_check
          %p1676 = pneg %p293
        $region82: #{tpu_custom_call.1} parent=79 // pred_check_branch
          %1678 = sbr.rel (%p1676) target = $region84
        $region83: #{tpu_custom_call.1} parent=79 // pred_region
          %s1679 = sand.u32 %s278, 1
          %s1680 = scalar_lea.sflag [#allocation4], %s1679
          %s1681 = sand.u32 %s278, 1
          %s1682 = smul.addr %s1681, 8
          %s1683 = scalar_lea.vmem [#allocation7], %s1682
          %1684 = dma.done %s1680, 128
        $region84: #{tpu_custom_call.1} parent=79 // pred_fallthru
          _
        // Predicated region
        $region85: #{tpu_custom_call.1} parent=79 // pred_check
          %p1685 = pneg %p321
        $region86: #{tpu_custom_call.1} parent=79 // pred_check_branch
          %1687 = sbr.rel (%p1685) target = $region88
        $region87: #{tpu_custom_call.1} parent=79 // pred_region
          %s1688 = sand.u32 %s306, 1
          %s1689 = scalar_lea.sflag [#allocation9], %s1688
          %s1690 = sand.u32 %s306, 1
          %s1691 = smul.addr %s1690, 8
          %s1692 = scalar_lea.vmem [#allocation8], %s1691
          %1693 = dma.done %s1689, 128
        $region88: #{tpu_custom_call.1} parent=79 // pred_fallthru
          _
      $region80: #{tpu_custom_call.1} parent=5 // pred_fallthru
        _
    $region6: #{tpu_custom_call.1} parent=1 // loop_footer
      %s32 = sadd.s32 1, %s28
    $region7: #{tpu_custom_call.1} parent=1 // loop_footer_branch
      %27 = sbr.rel target = $region3
    $region8: #{tpu_custom_call.1} parent=1 // loop_exit
      _
    %1694 = vsyncpa [#allocation3], 1
    %s1695 = scalar_lea.sflag [#allocation3], 1
    %1696 = vsyncpa %s1695, 1
    %1697 = vsyncpa [#allocation4], 1
    %s1698 = scalar_lea.sflag [#allocation4], 1
    %1699 = vsyncpa %s1698, 1
    %1700 = vsyncpa [#allocation9], 1
    %s1701 = scalar_lea.sflag [#allocation9], 1
    %1702 = vsyncpa %s1701, 1
    %1703 = vsyncpa [#allocation5], 1
    %s1704 = scalar_lea.sflag [#allocation5], 1
    %1705 = vsyncpa %s1704, 1

</llo_original>
